<compile_context>
chip_gen: v6e
topology: v6e:2x2x1
jax: 0.10.0
libtpu: 0.0.40
codegen_flags: <defaults>
</compile_context>

<pallas_src>
import functools
import math

import jax
import jax.numpy as jnp
from jax.experimental import pallas as pl
from jax.experimental.pallas import tpu as pltpu

EPS = 1e-5
NEG_INF = -1e30  # safe: row max is subtracted before exp, diagonal never masked


def _layer_norm(x, g, b):
    # E[x^2] - mu^2 form: the two lane reductions are independent (XLU overlap).
    mu = jnp.mean(x, axis=-1, keepdims=True)
    ms = jnp.mean(x * x, axis=-1, keepdims=True)
    var = ms - mu * mu
    return (x - mu) * jax.lax.rsqrt(var + EPS) * g + b


def _gelu_new(x):
    c = math.sqrt(2.0 / math.pi)
    return 0.5 * x * (1.0 + jnp.tanh(c * (x + 0.044715 * (x * x * x))))


# ----------------------------- fused forward kernel -----------------------------
def _pfa_kernel(x_ref, wpe_ref,
                ln1g_ref, ln1b_ref,
                wqkv_ref, bqkv_ref, wpr_ref, bpr_ref,
                ln2g_ref, ln2b_ref,
                wfc_ref, bfc_ref, wmp_ref, bmp_ref,
                lnfg_ref, lnfb_ref,
                o_ref, *, n_layer, n_head):
    f32 = jnp.float32
    _, t, d = x_ref.shape
    hd = d // n_head

    # Residual stream for ONE sequence stays in vregs/VMEM for the whole stack.
    h0 = x_ref[0].astype(f32) + wpe_ref[...].astype(f32)            # (T, D)

    # Causal additive mask built in-kernel (no HBM input, no cross-batch work).
    row = jax.lax.broadcasted_iota(jnp.int32, (t, t), 0)
    col = jax.lax.broadcasted_iota(jnp.int32, (t, t), 1)
    causal = jnp.where(col <= row, 0.0, NEG_INF).astype(f32)        # (T, T)

    def layer(l, h):
        # ------------------- attention sub-block -------------------
        a = _layer_norm(h, ln1g_ref[l], ln1b_ref[l])
        # ONE fused QKV matmul (scale already folded into the Q weights/bias).
        qkv = jnp.dot(a, wqkv_ref[l], preferred_element_type=f32) + bqkv_ref[l]
        heads = []
        for hh in range(n_head):             # static unroll (n_head = 4)
            q = qkv[:, 0 * d + hh * hd: 0 * d + (hh + 1) * hd]
            k = qkv[:, 1 * d + hh * hd: 1 * d + (hh + 1) * hd]
            v = qkv[:, 2 * d + hh * hd: 2 * d + (hh + 1) * hd]
            # q @ k^T via dot_general contracting lane dims (no explicit .T).
            s = jax.lax.dot_general(q, k, (((1,), (1,)), ((), ())),
                                    preferred_element_type=f32) + causal
            m = jnp.max(s, axis=-1, keepdims=True)
            p = jnp.exp(s - m)
            p = p * pl.reciprocal(jnp.sum(p, axis=-1, keepdims=True), approx=True)
            heads.append(jnp.dot(p, v, preferred_element_type=f32))  # (T, hd)
        # Merge heads along lanes, ONE output projection matmul.
        o_cat = jnp.concatenate(heads, axis=-1)                      # (T, D)
        h = h + jnp.dot(o_cat, wpr_ref[l], preferred_element_type=f32) + bpr_ref[l]

        # ---------------------- MLP sub-block ----------------------
        m2 = _layer_norm(h, ln2g_ref[l], ln2b_ref[l])
        f = jnp.dot(m2, wfc_ref[l], preferred_element_type=f32) + bfc_ref[l]
        f = _gelu_new(f)
        return h + jnp.dot(f, wmp_ref[l], preferred_element_type=f32) + bmp_ref[l]

    h = jax.lax.fori_loop(0, n_layer, layer, h0)

    # TODO(synk): dropout omitted (inference / eval semantics).
    o_ref[0] = _layer_norm(h, lnfg_ref[...], lnfb_ref[...]).astype(o_ref.dtype)


def make_pfa_forward(n_layer, n_head):
    kern = functools.partial(_pfa_kernel, n_layer=n_layer, n_head=n_head)

    def fwd(x, kp):
        B, T, D = x.shape
        wpe_t = kp["wpe"][:T]                                        # (T, D)

        weights = (wpe_t,
                   kp["ln1_g"], kp["ln1_b"],
                   kp["wqkv"], kp["bqkv"], kp["wpr"], kp["bpr"],
                   kp["ln2_g"], kp["ln2_b"],
                   kp["wfc"], kp["bfc"], kp["wmp"], kp["bmp"],
                   kp["lnf_g"], kp["lnf_b"])

        # Layer-invariant params: whole array resident in VMEM, no pipelining /
        # double-buffering across the batch grid.
        vmem_spec = pl.BlockSpec(memory_space=pltpu.MemorySpace.VMEM)

        out = pl.pallas_call(
            kern,
            grid=(B,),
            out_shape=jax.ShapeDtypeStruct((B, T, D), x.dtype),
            in_specs=[pl.BlockSpec((1, T, D), lambda b: (b, 0, 0))]
                     + [vmem_spec] * len(weights),
            out_specs=pl.BlockSpec((1, T, D), lambda b: (b, 0, 0)),
            compiler_params=pltpu.CompilerParams(
                dimension_semantics=("parallel",)),
        )(x, *weights)
        return out

    return fwd


# --------------------------- params (canonical layout) ---------------------------
def init_params(key, n_layer, n_embd, n_head, n_inner, max_pos):
    L, D, F = n_layer, n_embd, n_inner
    keys = jax.random.split(key, 1 + 8 * L)

    def w(i, shape, s=0.02):
        return s * jax.random.normal(keys[i], shape, jnp.float32)

    attn_w = jnp.stack([w(1 + 8 * l + 0, (D, 3 * D)) for l in range(L)])
    attn_b = jnp.stack([w(1 + 8 * l + 1, (1, 3 * D), 0.01) for l in range(L)])
    attn_proj_w = jnp.stack([w(1 + 8 * l + 2, (D, D)) for l in range(L)])
    attn_proj_b = jnp.stack([w(1 + 8 * l + 3, (1, D), 0.01) for l in range(L)])
    fc_w = jnp.stack([w(1 + 8 * l + 4, (D, F)) for l in range(L)])
    fc_b = jnp.stack([w(1 + 8 * l + 5, (1, F), 0.01) for l in range(L)])
    mlp_proj_w = jnp.stack([w(1 + 8 * l + 6, (F, D)) for l in range(L)])
    mlp_proj_b = jnp.stack([w(1 + 8 * l + 7, (1, D), 0.01) for l in range(L)])

    return {
        "wpe": w(0, (max_pos, D)),
        "ln1_g": jnp.ones((L, 1, D), jnp.float32),
        "ln1_b": jnp.zeros((L, 1, D), jnp.float32),
        "attn_w": attn_w, "attn_b": attn_b,
        "attn_proj_w": attn_proj_w, "attn_proj_b": attn_proj_b,
        "ln2_g": jnp.ones((L, 1, D), jnp.float32),
        "ln2_b": jnp.zeros((L, 1, D), jnp.float32),
        "fc_w": fc_w, "fc_b": fc_b,
        "mlp_proj_w": mlp_proj_w, "mlp_proj_b": mlp_proj_b,
        "lnf_g": jnp.ones((1, D), jnp.float32),
        "lnf_b": jnp.zeros((1, D), jnp.float32),
    }


def pack_params_for_kernel(params, n_head):
    """One-time re-layout: keep fused (D,3D) QKV, fold 1/sqrt(hd) into Q part."""
    L, D, _ = params["attn_w"].shape
    hd = D // n_head
    scale = 1.0 / math.sqrt(hd)
    q_scale = jnp.concatenate([jnp.full((D,), scale, jnp.float32),
                               jnp.ones((2 * D,), jnp.float32)])[None, None, :]
    return {
        "wpe": params["wpe"],
        "ln1_g": params["ln1_g"], "ln1_b": params["ln1_b"],
        "wqkv": params["attn_w"] * q_scale,        # (L, D, 3D), Q pre-scaled
        "bqkv": params["attn_b"] * q_scale,        # (L, 1, 3D)
        "wpr": params["attn_proj_w"],              # (L, D, D)
        "bpr": params["attn_proj_b"],              # (L, 1, D)
        "ln2_g": params["ln2_g"], "ln2_b": params["ln2_b"],
        "wfc": params["fc_w"], "bfc": params["fc_b"],
        "wmp": params["mlp_proj_w"], "bmp": params["mlp_proj_b"],
        "lnf_g": params["lnf_g"], "lnf_b": params["lnf_b"],
    }


# ------------------------------ pure-JAX reference ------------------------------
def pfa_reference(x, params, n_layer, n_head):
    B, T, D = x.shape
    hd = D // n_head
    h = x + params["wpe"][:T][None]
    mask = jnp.tril(jnp.ones((T, T), bool))
    for l in range(n_layer):
        a = _layer_norm(h, params["ln1_g"][l], params["ln1_b"][l])
        qkv = a @ params["attn_w"][l] + params["attn_b"][l]
        q, k, v = jnp.split(qkv, 3, axis=-1)
        q = q.reshape(B, T, n_head, hd).transpose(0, 2, 1, 3)
        k = k.reshape(B, T, n_head, hd).transpose(0, 2, 1, 3)
        v = v.reshape(B, T, n_head, hd).transpose(0, 2, 1, 3)
        s = jnp.einsum("bhqd,bhkd->bhqk", q, k) / math.sqrt(hd)
        s = jnp.where(mask[None, None], s, NEG_INF)
        p = jax.nn.softmax(s, axis=-1)
        o = jnp.einsum("bhqk,bhkd->bhqd", p, v).transpose(0, 2, 1, 3).reshape(B, T, D)
        h = h + (o @ params["attn_proj_w"][l] + params["attn_proj_b"][l])
        m = _layer_norm(h, params["ln2_g"][l], params["ln2_b"][l])
        f = _gelu_new(m @ params["fc_w"][l] + params["fc_b"][l])
        h = h + (f @ params["mlp_proj_w"][l] + params["mlp_proj_b"][l])
    return _layer_norm(h, params["lnf_g"], params["lnf_b"])


if __name__ == "__main__":
    B, T, D = 2, 8, 32
    n_layer, n_head, n_inner, max_pos = 6, 4, 4 * D, 16

    key = jax.random.PRNGKey(0)
    k_x, k_p = jax.random.split(key)
    x = jax.random.normal(k_x, (B, T, D), jnp.float32)
    params = init_params(k_p, n_layer, D, n_head, n_inner, max_pos)
    kparams = pack_params_for_kernel(params, n_head)

    fwd = jax.jit(make_pfa_forward(n_layer, n_head))
    out = jax.block_until_ready(fwd(x, kparams))

    assert out.shape == (B, T, D) and out.dtype == jnp.float32
    assert bool(jnp.all(jnp.isfinite(out)))

    ref = pfa_reference(x, params, n_layer, n_head)
    max_err = float(jnp.max(jnp.abs(out - ref)))
    assert bool(jnp.allclose(out, ref, rtol=2e-2, atol=2e-2)), max_err

    print("KERNEL_OK")
</pallas_src>

<mosaic_0001>
module attributes {stable_mosaic.version = 11 : i64} {
  func.func @_pfa_kernel(%arg0: i32, %arg1: memref<1x8x32xf32, #tpu.memory_space<vmem>>, %arg2: memref<8x32xf32, #tpu.memory_space<vmem>>, %arg3: memref<6x1x32xf32, #tpu.memory_space<vmem>>, %arg4: memref<6x1x32xf32, #tpu.memory_space<vmem>>, %arg5: memref<6x32x96xf32, #tpu.memory_space<vmem>>, %arg6: memref<6x1x96xf32, #tpu.memory_space<vmem>>, %arg7: memref<6x32x32xf32, #tpu.memory_space<vmem>>, %arg8: memref<6x1x32xf32, #tpu.memory_space<vmem>>, %arg9: memref<6x1x32xf32, #tpu.memory_space<vmem>>, %arg10: memref<6x1x32xf32, #tpu.memory_space<vmem>>, %arg11: memref<6x32x128xf32, #tpu.memory_space<vmem>>, %arg12: memref<6x1x128xf32, #tpu.memory_space<vmem>>, %arg13: memref<6x128x32xf32, #tpu.memory_space<vmem>>, %arg14: memref<6x1x32xf32, #tpu.memory_space<vmem>>, %arg15: memref<1x32xf32, #tpu.memory_space<vmem>>, %arg16: memref<1x32xf32, #tpu.memory_space<vmem>>, %arg17: memref<1x8x32xf32, #tpu.memory_space<vmem>>) attributes {dimension_semantics = [#tpu.dimension_semantics<parallel>], iteration_bounds = array<i64: 2>, scalar_prefetch = 0 : i64, scratch_operands = 0 : i64, tpu.core_type = #tpu.core_type<tc>, window_params = [{transform_indices = @transform_0, window_bounds = array<i64: 1, 8, 32>}, {pipeline_mode = #tpu.pipeline_mode<synchronous>, transform_indices = @transform_1, window_bounds = array<i64: 8, 32>}, {pipeline_mode = #tpu.pipeline_mode<synchronous>, transform_indices = @transform_2, window_bounds = array<i64: 6, 1, 32>}, {pipeline_mode = #tpu.pipeline_mode<synchronous>, transform_indices = @transform_3, window_bounds = array<i64: 6, 1, 32>}, {pipeline_mode = #tpu.pipeline_mode<synchronous>, transform_indices = @transform_4, window_bounds = array<i64: 6, 32, 96>}, {pipeline_mode = #tpu.pipeline_mode<synchronous>, transform_indices = @transform_5, window_bounds = array<i64: 6, 1, 96>}, {pipeline_mode = #tpu.pipeline_mode<synchronous>, transform_indices = @transform_6, window_bounds = array<i64: 6, 32, 32>}, {pipeline_mode = #tpu.pipeline_mode<synchronous>, transform_indices = @transform_7, window_bounds = array<i64: 6, 1, 32>}, {pipeline_mode = #tpu.pipeline_mode<synchronous>, transform_indices = @transform_8, window_bounds = array<i64: 6, 1, 32>}, {pipeline_mode = #tpu.pipeline_mode<synchronous>, transform_indices = @transform_9, window_bounds = array<i64: 6, 1, 32>}, {pipeline_mode = #tpu.pipeline_mode<synchronous>, transform_indices = @transform_10, window_bounds = array<i64: 6, 32, 128>}, {pipeline_mode = #tpu.pipeline_mode<synchronous>, transform_indices = @transform_11, window_bounds = array<i64: 6, 1, 128>}, {pipeline_mode = #tpu.pipeline_mode<synchronous>, transform_indices = @transform_12, window_bounds = array<i64: 6, 128, 32>}, {pipeline_mode = #tpu.pipeline_mode<synchronous>, transform_indices = @transform_13, window_bounds = array<i64: 6, 1, 32>}, {pipeline_mode = #tpu.pipeline_mode<synchronous>, transform_indices = @transform_14, window_bounds = array<i64: 1, 32>}, {pipeline_mode = #tpu.pipeline_mode<synchronous>, transform_indices = @transform_15, window_bounds = array<i64: 1, 32>}, {transform_indices = @transform_16, window_bounds = array<i64: 1, 8, 32>}]} {
    %c0 = arith.constant 0 : index
    %c0_0 = arith.constant 0 : index
    %c0_1 = arith.constant 0 : index
    %0 = vector.load %arg1[%c0, %c0_0, %c0_1] : memref<1x8x32xf32, #tpu.memory_space<vmem>>, vector<1x8x32xf32>
    %1 = vector.shape_cast %0 : vector<1x8x32xf32> to vector<8x32xf32>
    %c0_2 = arith.constant 0 : index
    %c0_3 = arith.constant 0 : index
    %2 = vector.load %arg2[%c0_2, %c0_3] : memref<8x32xf32, #tpu.memory_space<vmem>>, vector<8x32xf32>
    %3 = arith.addf %1, %2 : vector<8x32xf32>
    %4 = tpu.iota {dimensions = array<i32: 0>} : vector<8x8xi32>
    %5 = tpu.iota {dimensions = array<i32: 1>} : vector<8x8xi32>
    %6 = arith.cmpi sle, %5, %4 : vector<8x8xi32>
    %cst = arith.constant 0.000000e+00 : f32
    %cst_4 = arith.constant -1.000000e+30 : f32
    %7 = vector.broadcast %cst : f32 to vector<8x8xf32>
    %8 = vector.broadcast %cst_4 : f32 to vector<8x8xf32>
    %9 = arith.select %6, %7, %8 : vector<8x8xi1>, vector<8x8xf32>
    %c0_i32 = arith.constant 0 : i32
    %c6_i32 = arith.constant 6 : i32
    %10 = arith.addi %c0_i32, %c6_i32 : i32
    %c1_i32 = arith.constant 1 : i32
    %11 = scf.for %arg18 = %c0_i32 to %10 step %c1_i32 iter_args(%arg19 = %3) -> (vector<8x32xf32>)  : i32 {
      %39 = arith.index_cast %arg18 : i32 to index
      %c0_18 = arith.constant 0 : index
      %c0_19 = arith.constant 0 : index
      %40 = vector.load %arg3[%39, %c0_18, %c0_19] : memref<6x1x32xf32, #tpu.memory_space<vmem>>, vector<1x1x32xf32>
      %41 = vector.shape_cast %40 : vector<1x1x32xf32> to vector<1x32xf32>
      %42 = arith.index_cast %arg18 : i32 to index
      %c0_20 = arith.constant 0 : index
      %c0_21 = arith.constant 0 : index
      %43 = vector.load %arg4[%42, %c0_20, %c0_21] : memref<6x1x32xf32, #tpu.memory_space<vmem>>, vector<1x1x32xf32>
      %44 = vector.shape_cast %43 : vector<1x1x32xf32> to vector<1x32xf32>
      %cst_22 = arith.constant dense<0.000000e+00> : vector<8xf32>
      %45 = vector.multi_reduction <add>, %arg19, %cst_22 [1] : vector<8x32xf32> to vector<8xf32>
      %46 = vector.shape_cast %45 : vector<8xf32> to vector<8x1xf32>
      %cst_23 = arith.constant 3.200000e+01 : f32
      %47 = vector.broadcast %cst_23 : f32 to vector<8x1xf32>
      %48 = arith.divf %46, %47 : vector<8x1xf32>
      %49 = arith.mulf %arg19, %arg19 : vector<8x32xf32>
      %cst_24 = arith.constant dense<0.000000e+00> : vector<8xf32>
      %50 = vector.multi_reduction <add>, %49, %cst_24 [1] : vector<8x32xf32> to vector<8xf32>
      %51 = vector.shape_cast %50 : vector<8xf32> to vector<8x1xf32>
      %cst_25 = arith.constant 3.200000e+01 : f32
      %52 = vector.broadcast %cst_25 : f32 to vector<8x1xf32>
      %53 = arith.divf %51, %52 : vector<8x1xf32>
      %54 = arith.mulf %48, %48 : vector<8x1xf32>
      %55 = arith.subf %53, %54 : vector<8x1xf32>
      %56 = vector.broadcast %48 : vector<8x1xf32> to vector<8x32xf32>
      %57 = arith.subf %arg19, %56 : vector<8x32xf32>
      %cst_26 = arith.constant 9.99999974E-6 : f32
      %58 = vector.broadcast %cst_26 : f32 to vector<8x1xf32>
      %59 = arith.addf %55, %58 : vector<8x1xf32>
      %60 = math.rsqrt %59 : vector<8x1xf32>
      %61 = vector.broadcast %60 : vector<8x1xf32> to vector<8x32xf32>
      %62 = arith.mulf %57, %61 : vector<8x32xf32>
      %63 = vector.broadcast %41 : vector<1x32xf32> to vector<8x32xf32>
      %64 = arith.mulf %62, %63 : vector<8x32xf32>
      %65 = vector.broadcast %44 : vector<1x32xf32> to vector<8x32xf32>
      %66 = arith.addf %64, %65 : vector<8x32xf32>
      %67 = arith.index_cast %arg18 : i32 to index
      %c0_27 = arith.constant 0 : index
      %c0_28 = arith.constant 0 : index
      %68 = vector.load %arg5[%67, %c0_27, %c0_28] : memref<6x32x96xf32, #tpu.memory_space<vmem>>, vector<1x32x96xf32>
      %69 = vector.shape_cast %68 : vector<1x32x96xf32> to vector<32x96xf32>
      %cst_29 = arith.constant dense<0.000000e+00> : vector<8x96xf32>
      %70 = tpu.matmul %66, %69, %cst_29 {dimension_numbers = #tpu.dot_dimension_numbers<[1], [0], [0], [1], [0, 0, 1, 1], [], []>} : vector<8x32xf32>, vector<32x96xf32>, vector<8x96xf32> -> vector<8x96xf32>
      %71 = arith.index_cast %arg18 : i32 to index
      %c0_30 = arith.constant 0 : index
      %c0_31 = arith.constant 0 : index
      %72 = vector.load %arg6[%71, %c0_30, %c0_31] : memref<6x1x96xf32, #tpu.memory_space<vmem>>, vector<1x1x96xf32>
      %73 = vector.shape_cast %72 : vector<1x1x96xf32> to vector<1x96xf32>
      %74 = vector.broadcast %73 : vector<1x96xf32> to vector<8x96xf32>
      %75 = arith.addf %70, %74 : vector<8x96xf32>
      %76 = vector.extract_strided_slice %75 {offsets = [0, 0], sizes = [8, 8], strides = [1, 1]} : vector<8x96xf32> to vector<8x8xf32>
      %77 = vector.extract_strided_slice %75 {offsets = [0, 32], sizes = [8, 8], strides = [1, 1]} : vector<8x96xf32> to vector<8x8xf32>
      %78 = vector.extract_strided_slice %75 {offsets = [0, 64], sizes = [8, 8], strides = [1, 1]} : vector<8x96xf32> to vector<8x8xf32>
      %cst_32 = arith.constant dense<0.000000e+00> : vector<8x8xf32>
      %79 = tpu.matmul %76, %77, %cst_32 {dimension_numbers = #tpu.dot_dimension_numbers<[1], [1], [0], [0], [0, 0, 1, 0], [], []>} : vector<8x8xf32>, vector<8x8xf32>, vector<8x8xf32> -> vector<8x8xf32>
      %80 = arith.addf %79, %9 : vector<8x8xf32>
      %cst_33 = arith.constant dense<0xFF800000> : vector<8xf32>
      %81 = vector.multi_reduction <maximumf>, %80, %cst_33 [1] : vector<8x8xf32> to vector<8xf32>
      %82 = vector.shape_cast %81 : vector<8xf32> to vector<8x1xf32>
      %83 = vector.broadcast %82 : vector<8x1xf32> to vector<8x8xf32>
      %84 = arith.subf %80, %83 : vector<8x8xf32>
      %85 = math.exp %84 : vector<8x8xf32>
      %cst_34 = arith.constant dense<0.000000e+00> : vector<8xf32>
      %86 = vector.multi_reduction <add>, %85, %cst_34 [1] : vector<8x8xf32> to vector<8xf32>
      %87 = vector.shape_cast %86 : vector<8xf32> to vector<8x1xf32>
      %88 = tpu.reciprocal %87 {approx = true} : vector<8x1xf32> -> vector<8x1xf32>
      %89 = vector.broadcast %88 : vector<8x1xf32> to vector<8x8xf32>
      %90 = arith.mulf %85, %89 : vector<8x8xf32>
      %cst_35 = arith.constant dense<0.000000e+00> : vector<8x8xf32>
      %91 = tpu.matmul %90, %78, %cst_35 {dimension_numbers = #tpu.dot_dimension_numbers<[1], [0], [0], [1], [0, 0, 1, 1], [], []>} : vector<8x8xf32>, vector<8x8xf32>, vector<8x8xf32> -> vector<8x8xf32>
      %92 = vector.extract_strided_slice %75 {offsets = [0, 8], sizes = [8, 8], strides = [1, 1]} : vector<8x96xf32> to vector<8x8xf32>
      %93 = vector.extract_strided_slice %75 {offsets = [0, 40], sizes = [8, 8], strides = [1, 1]} : vector<8x96xf32> to vector<8x8xf32>
      %94 = vector.extract_strided_slice %75 {offsets = [0, 72], sizes = [8, 8], strides = [1, 1]} : vector<8x96xf32> to vector<8x8xf32>
      %cst_36 = arith.constant dense<0.000000e+00> : vector<8x8xf32>
      %95 = tpu.matmul %92, %93, %cst_36 {dimension_numbers = #tpu.dot_dimension_numbers<[1], [1], [0], [0], [0, 0, 1, 0], [], []>} : vector<8x8xf32>, vector<8x8xf32>, vector<8x8xf32> -> vector<8x8xf32>
      %96 = arith.addf %95, %9 : vector<8x8xf32>
      %cst_37 = arith.constant dense<0xFF800000> : vector<8xf32>
      %97 = vector.multi_reduction <maximumf>, %96, %cst_37 [1] : vector<8x8xf32> to vector<8xf32>
      %98 = vector.shape_cast %97 : vector<8xf32> to vector<8x1xf32>
      %99 = vector.broadcast %98 : vector<8x1xf32> to vector<8x8xf32>
      %100 = arith.subf %96, %99 : vector<8x8xf32>
      %101 = math.exp %100 : vector<8x8xf32>
      %cst_38 = arith.constant dense<0.000000e+00> : vector<8xf32>
      %102 = vector.multi_reduction <add>, %101, %cst_38 [1] : vector<8x8xf32> to vector<8xf32>
      %103 = vector.shape_cast %102 : vector<8xf32> to vector<8x1xf32>
      %104 = tpu.reciprocal %103 {approx = true} : vector<8x1xf32> -> vector<8x1xf32>
      %105 = vector.broadcast %104 : vector<8x1xf32> to vector<8x8xf32>
      %106 = arith.mulf %101, %105 : vector<8x8xf32>
      %cst_39 = arith.constant dense<0.000000e+00> : vector<8x8xf32>
      %107 = tpu.matmul %106, %94, %cst_39 {dimension_numbers = #tpu.dot_dimension_numbers<[1], [0], [0], [1], [0, 0, 1, 1], [], []>} : vector<8x8xf32>, vector<8x8xf32>, vector<8x8xf32> -> vector<8x8xf32>
      %108 = vector.extract_strided_slice %75 {offsets = [0, 16], sizes = [8, 8], strides = [1, 1]} : vector<8x96xf32> to vector<8x8xf32>
      %109 = vector.extract_strided_slice %75 {offsets = [0, 48], sizes = [8, 8], strides = [1, 1]} : vector<8x96xf32> to vector<8x8xf32>
      %110 = vector.extract_strided_slice %75 {offsets = [0, 80], sizes = [8, 8], strides = [1, 1]} : vector<8x96xf32> to vector<8x8xf32>
      %cst_40 = arith.constant dense<0.000000e+00> : vector<8x8xf32>
      %111 = tpu.matmul %108, %109, %cst_40 {dimension_numbers = #tpu.dot_dimension_numbers<[1], [1], [0], [0], [0, 0, 1, 0], [], []>} : vector<8x8xf32>, vector<8x8xf32>, vector<8x8xf32> -> vector<8x8xf32>
      %112 = arith.addf %111, %9 : vector<8x8xf32>
      %cst_41 = arith.constant dense<0xFF800000> : vector<8xf32>
      %113 = vector.multi_reduction <maximumf>, %112, %cst_41 [1] : vector<8x8xf32> to vector<8xf32>
      %114 = vector.shape_cast %113 : vector<8xf32> to vector<8x1xf32>
      %115 = vector.broadcast %114 : vector<8x1xf32> to vector<8x8xf32>
      %116 = arith.subf %112, %115 : vector<8x8xf32>
      %117 = math.exp %116 : vector<8x8xf32>
      %cst_42 = arith.constant dense<0.000000e+00> : vector<8xf32>
      %118 = vector.multi_reduction <add>, %117, %cst_42 [1] : vector<8x8xf32> to vector<8xf32>
      %119 = vector.shape_cast %118 : vector<8xf32> to vector<8x1xf32>
      %120 = tpu.reciprocal %119 {approx = true} : vector<8x1xf32> -> vector<8x1xf32>
      %121 = vector.broadcast %120 : vector<8x1xf32> to vector<8x8xf32>
      %122 = arith.mulf %117, %121 : vector<8x8xf32>
      %cst_43 = arith.constant dense<0.000000e+00> : vector<8x8xf32>
      %123 = tpu.matmul %122, %110, %cst_43 {dimension_numbers = #tpu.dot_dimension_numbers<[1], [0], [0], [1], [0, 0, 1, 1], [], []>} : vector<8x8xf32>, vector<8x8xf32>, vector<8x8xf32> -> vector<8x8xf32>
      %124 = vector.extract_strided_slice %75 {offsets = [0, 24], sizes = [8, 8], strides = [1, 1]} : vector<8x96xf32> to vector<8x8xf32>
      %125 = vector.extract_strided_slice %75 {offsets = [0, 56], sizes = [8, 8], strides = [1, 1]} : vector<8x96xf32> to vector<8x8xf32>
      %126 = vector.extract_strided_slice %75 {offsets = [0, 88], sizes = [8, 8], strides = [1, 1]} : vector<8x96xf32> to vector<8x8xf32>
      %cst_44 = arith.constant dense<0.000000e+00> : vector<8x8xf32>
      %127 = tpu.matmul %124, %125, %cst_44 {dimension_numbers = #tpu.dot_dimension_numbers<[1], [1], [0], [0], [0, 0, 1, 0], [], []>} : vector<8x8xf32>, vector<8x8xf32>, vector<8x8xf32> -> vector<8x8xf32>
      %128 = arith.addf %127, %9 : vector<8x8xf32>
      %cst_45 = arith.constant dense<0xFF800000> : vector<8xf32>
      %129 = vector.multi_reduction <maximumf>, %128, %cst_45 [1] : vector<8x8xf32> to vector<8xf32>
      %130 = vector.shape_cast %129 : vector<8xf32> to vector<8x1xf32>
      %131 = vector.broadcast %130 : vector<8x1xf32> to vector<8x8xf32>
      %132 = arith.subf %128, %131 : vector<8x8xf32>
      %133 = math.exp %132 : vector<8x8xf32>
      %cst_46 = arith.constant dense<0.000000e+00> : vector<8xf32>
      %134 = vector.multi_reduction <add>, %133, %cst_46 [1] : vector<8x8xf32> to vector<8xf32>
      %135 = vector.shape_cast %134 : vector<8xf32> to vector<8x1xf32>
      %136 = tpu.reciprocal %135 {approx = true} : vector<8x1xf32> -> vector<8x1xf32>
      %137 = vector.broadcast %136 : vector<8x1xf32> to vector<8x8xf32>
      %138 = arith.mulf %133, %137 : vector<8x8xf32>
      %cst_47 = arith.constant dense<0.000000e+00> : vector<8x8xf32>
      %139 = tpu.matmul %138, %126, %cst_47 {dimension_numbers = #tpu.dot_dimension_numbers<[1], [0], [0], [1], [0, 0, 1, 1], [], []>} : vector<8x8xf32>, vector<8x8xf32>, vector<8x8xf32> -> vector<8x8xf32>
      %140 = tpu.concatenate %91, %107, %123, %139 in 1 : vector<8x8xf32>, vector<8x8xf32>, vector<8x8xf32>, vector<8x8xf32> -> vector<8x32xf32>
      %141 = arith.index_cast %arg18 : i32 to index
      %c0_48 = arith.constant 0 : index
      %c0_49 = arith.constant 0 : index
      %142 = vector.load %arg7[%141, %c0_48, %c0_49] : memref<6x32x32xf32, #tpu.memory_space<vmem>>, vector<1x32x32xf32>
      %143 = vector.shape_cast %142 : vector<1x32x32xf32> to vector<32x32xf32>
      %cst_50 = arith.constant dense<0.000000e+00> : vector<8x32xf32>
      %144 = tpu.matmul %140, %143, %cst_50 {dimension_numbers = #tpu.dot_dimension_numbers<[1], [0], [0], [1], [0, 0, 1, 1], [], []>} : vector<8x32xf32>, vector<32x32xf32>, vector<8x32xf32> -> vector<8x32xf32>
      %145 = arith.addf %arg19, %144 : vector<8x32xf32>
      %146 = arith.index_cast %arg18 : i32 to index
      %c0_51 = arith.constant 0 : index
      %c0_52 = arith.constant 0 : index
      %147 = vector.load %arg8[%146, %c0_51, %c0_52] : memref<6x1x32xf32, #tpu.memory_space<vmem>>, vector<1x1x32xf32>
      %148 = vector.shape_cast %147 : vector<1x1x32xf32> to vector<1x32xf32>
      %149 = vector.broadcast %148 : vector<1x32xf32> to vector<8x32xf32>
      %150 = arith.addf %145, %149 : vector<8x32xf32>
      %151 = arith.index_cast %arg18 : i32 to index
      %c0_53 = arith.constant 0 : index
      %c0_54 = arith.constant 0 : index
      %152 = vector.load %arg9[%151, %c0_53, %c0_54] : memref<6x1x32xf32, #tpu.memory_space<vmem>>, vector<1x1x32xf32>
      %153 = vector.shape_cast %152 : vector<1x1x32xf32> to vector<1x32xf32>
      %154 = arith.index_cast %arg18 : i32 to index
      %c0_55 = arith.constant 0 : index
      %c0_56 = arith.constant 0 : index
      %155 = vector.load %arg10[%154, %c0_55, %c0_56] : memref<6x1x32xf32, #tpu.memory_space<vmem>>, vector<1x1x32xf32>
      %156 = vector.shape_cast %155 : vector<1x1x32xf32> to vector<1x32xf32>
      %cst_57 = arith.constant dense<0.000000e+00> : vector<8xf32>
      %157 = vector.multi_reduction <add>, %150, %cst_57 [1] : vector<8x32xf32> to vector<8xf32>
      %158 = vector.shape_cast %157 : vector<8xf32> to vector<8x1xf32>
      %cst_58 = arith.constant 3.200000e+01 : f32
      %159 = vector.broadcast %cst_58 : f32 to vector<8x1xf32>
      %160 = arith.divf %158, %159 : vector<8x1xf32>
      %161 = arith.mulf %150, %150 : vector<8x32xf32>
      %cst_59 = arith.constant dense<0.000000e+00> : vector<8xf32>
      %162 = vector.multi_reduction <add>, %161, %cst_59 [1] : vector<8x32xf32> to vector<8xf32>
      %163 = vector.shape_cast %162 : vector<8xf32> to vector<8x1xf32>
      %cst_60 = arith.constant 3.200000e+01 : f32
      %164 = vector.broadcast %cst_60 : f32 to vector<8x1xf32>
      %165 = arith.divf %163, %164 : vector<8x1xf32>
      %166 = arith.mulf %160, %160 : vector<8x1xf32>
      %167 = arith.subf %165, %166 : vector<8x1xf32>
      %168 = vector.broadcast %160 : vector<8x1xf32> to vector<8x32xf32>
      %169 = arith.subf %150, %168 : vector<8x32xf32>
      %cst_61 = arith.constant 9.99999974E-6 : f32
      %170 = vector.broadcast %cst_61 : f32 to vector<8x1xf32>
      %171 = arith.addf %167, %170 : vector<8x1xf32>
      %172 = math.rsqrt %171 : vector<8x1xf32>
      %173 = vector.broadcast %172 : vector<8x1xf32> to vector<8x32xf32>
      %174 = arith.mulf %169, %173 : vector<8x32xf32>
      %175 = vector.broadcast %153 : vector<1x32xf32> to vector<8x32xf32>
      %176 = arith.mulf %174, %175 : vector<8x32xf32>
      %177 = vector.broadcast %156 : vector<1x32xf32> to vector<8x32xf32>
      %178 = arith.addf %176, %177 : vector<8x32xf32>
      %179 = arith.index_cast %arg18 : i32 to index
      %c0_62 = arith.constant 0 : index
      %c0_63 = arith.constant 0 : index
      %180 = vector.load %arg11[%179, %c0_62, %c0_63] : memref<6x32x128xf32, #tpu.memory_space<vmem>>, vector<1x32x128xf32>
      %181 = vector.shape_cast %180 : vector<1x32x128xf32> to vector<32x128xf32>
      %cst_64 = arith.constant dense<0.000000e+00> : vector<8x128xf32>
      %182 = tpu.matmul %178, %181, %cst_64 {dimension_numbers = #tpu.dot_dimension_numbers<[1], [0], [0], [1], [0, 0, 1, 1], [], []>} : vector<8x32xf32>, vector<32x128xf32>, vector<8x128xf32> -> vector<8x128xf32>
      %183 = arith.index_cast %arg18 : i32 to index
      %c0_65 = arith.constant 0 : index
      %c0_66 = arith.constant 0 : index
      %184 = vector.load %arg12[%183, %c0_65, %c0_66] : memref<6x1x128xf32, #tpu.memory_space<vmem>>, vector<1x1x128xf32>
      %185 = vector.shape_cast %184 : vector<1x1x128xf32> to vector<1x128xf32>
      %186 = vector.broadcast %185 : vector<1x128xf32> to vector<8x128xf32>
      %187 = arith.addf %182, %186 : vector<8x128xf32>
      %cst_67 = arith.constant 5.000000e-01 : f32
      %188 = vector.broadcast %cst_67 : f32 to vector<8x128xf32>
      %189 = arith.mulf %188, %187 : vector<8x128xf32>
      %190 = arith.mulf %187, %187 : vector<8x128xf32>
      %191 = arith.mulf %190, %187 : vector<8x128xf32>
      %cst_68 = arith.constant 4.471500e-02 : f32
      %192 = vector.broadcast %cst_68 : f32 to vector<8x128xf32>
      %193 = arith.mulf %192, %191 : vector<8x128xf32>
      %194 = arith.addf %187, %193 : vector<8x128xf32>
      %cst_69 = arith.constant 0.797884583 : f32
      %195 = vector.broadcast %cst_69 : f32 to vector<8x128xf32>
      %196 = arith.mulf %195, %194 : vector<8x128xf32>
      %197 = math.tanh %196 : vector<8x128xf32>
      %cst_70 = arith.constant 1.000000e+00 : f32
      %198 = vector.broadcast %cst_70 : f32 to vector<8x128xf32>
      %199 = arith.addf %198, %197 : vector<8x128xf32>
      %200 = arith.mulf %189, %199 : vector<8x128xf32>
      %201 = arith.index_cast %arg18 : i32 to index
      %c0_71 = arith.constant 0 : index
      %c0_72 = arith.constant 0 : index
      %202 = vector.load %arg13[%201, %c0_71, %c0_72] : memref<6x128x32xf32, #tpu.memory_space<vmem>>, vector<1x128x32xf32>
      %203 = vector.shape_cast %202 : vector<1x128x32xf32> to vector<128x32xf32>
      %cst_73 = arith.constant dense<0.000000e+00> : vector<8x32xf32>
      %204 = tpu.matmul %200, %203, %cst_73 {dimension_numbers = #tpu.dot_dimension_numbers<[1], [0], [0], [1], [0, 0, 1, 1], [], []>} : vector<8x128xf32>, vector<128x32xf32>, vector<8x32xf32> -> vector<8x32xf32>
      %205 = arith.addf %150, %204 : vector<8x32xf32>
      %206 = arith.index_cast %arg18 : i32 to index
      %c0_74 = arith.constant 0 : index
      %c0_75 = arith.constant 0 : index
      %207 = vector.load %arg14[%206, %c0_74, %c0_75] : memref<6x1x32xf32, #tpu.memory_space<vmem>>, vector<1x1x32xf32>
      %208 = vector.shape_cast %207 : vector<1x1x32xf32> to vector<1x32xf32>
      %209 = vector.broadcast %208 : vector<1x32xf32> to vector<8x32xf32>
      %210 = arith.addf %205, %209 : vector<8x32xf32>
      scf.yield %210 : vector<8x32xf32>
    }
    %c6_i32_5 = arith.constant 6 : i32
    %c0_6 = arith.constant 0 : index
    %c0_7 = arith.constant 0 : index
    %12 = vector.load %arg15[%c0_6, %c0_7] : memref<1x32xf32, #tpu.memory_space<vmem>>, vector<1x32xf32>
    %c0_8 = arith.constant 0 : index
    %c0_9 = arith.constant 0 : index
    %13 = vector.load %arg16[%c0_8, %c0_9] : memref<1x32xf32, #tpu.memory_space<vmem>>, vector<1x32xf32>
    %cst_10 = arith.constant dense<0.000000e+00> : vector<8xf32>
    %14 = vector.multi_reduction <add>, %11, %cst_10 [1] : vector<8x32xf32> to vector<8xf32>
    %15 = vector.shape_cast %14 : vector<8xf32> to vector<8x1xf32>
    %cst_11 = arith.constant 3.200000e+01 : f32
    %16 = vector.broadcast %cst_11 : f32 to vector<8x1xf32>
    %17 = arith.divf %15, %16 : vector<8x1xf32>
    %18 = arith.mulf %11, %11 : vector<8x32xf32>
    %cst_12 = arith.constant dense<0.000000e+00> : vector<8xf32>
    %19 = vector.multi_reduction <add>, %18, %cst_12 [1] : vector<8x32xf32> to vector<8xf32>
    %20 = vector.shape_cast %19 : vector<8xf32> to vector<8x1xf32>
    %cst_13 = arith.constant 3.200000e+01 : f32
    %21 = vector.broadcast %cst_13 : f32 to vector<8x1xf32>
    %22 = arith.divf %20, %21 : vector<8x1xf32>
    %23 = arith.mulf %17, %17 : vector<8x1xf32>
    %24 = arith.subf %22, %23 : vector<8x1xf32>
    %25 = vector.broadcast %17 : vector<8x1xf32> to vector<8x32xf32>
    %26 = arith.subf %11, %25 : vector<8x32xf32>
    %cst_14 = arith.constant 9.99999974E-6 : f32
    %27 = vector.broadcast %cst_14 : f32 to vector<8x1xf32>
    %28 = arith.addf %24, %27 : vector<8x1xf32>
    %29 = math.rsqrt %28 : vector<8x1xf32>
    %30 = vector.broadcast %29 : vector<8x1xf32> to vector<8x32xf32>
    %31 = arith.mulf %26, %30 : vector<8x32xf32>
    %32 = vector.broadcast %12 : vector<1x32xf32> to vector<8x32xf32>
    %33 = arith.mulf %31, %32 : vector<8x32xf32>
    %34 = vector.broadcast %13 : vector<1x32xf32> to vector<8x32xf32>
    %35 = arith.addf %33, %34 : vector<8x32xf32>
    %c0_15 = arith.constant 0 : index
    %c0_16 = arith.constant 0 : index
    %c0_17 = arith.constant 0 : index
    %36 = vector.load %arg17[%c0_15, %c0_16, %c0_17] : memref<1x8x32xf32, #tpu.memory_space<vmem>>, vector<1x8x32xf32>
    %37 = vector.shape_cast %36 : vector<1x8x32xf32> to vector<8x32xf32>
    %38 = vector.shape_cast %35 : vector<8x32xf32> to vector<1x8x32xf32>
    tpu.vector_store %arg17[%c0_15, %c0_16, %c0_17], %38 {strides = array<i32>} : memref<1x8x32xf32, #tpu.memory_space<vmem>>, vector<1x8x32xf32>,
    return
  }
  func.func @transform_0(%arg0: i32) -> (i32, i32, i32) {
    %c0_i32 = arith.constant 0 : i32
    %c0_i32_0 = arith.constant 0 : i32
    %c0_i32_1 = arith.constant 0 : i32
    return %arg0, %c0_i32, %c0_i32_0 : i32, i32, i32
  }
  func.func @transform_1(%arg0: i32) -> (i32, i32) {
    %c0_i32 = arith.constant 0 : i32
    %c0_i32_0 = arith.constant 0 : i32
    %c0_i32_1 = arith.constant 0 : i32
    return %c0_i32, %c0_i32_0 : i32, i32
  }
  func.func @transform_2(%arg0: i32) -> (i32, i32, i32) {
    %c0_i32 = arith.constant 0 : i32
    %c0_i32_0 = arith.constant 0 : i32
    %c0_i32_1 = arith.constant 0 : i32
    %c0_i32_2 = arith.constant 0 : i32
    return %c0_i32, %c0_i32_0, %c0_i32_1 : i32, i32, i32
  }
  func.func @transform_3(%arg0: i32) -> (i32, i32, i32) {
    %c0_i32 = arith.constant 0 : i32
    %c0_i32_0 = arith.constant 0 : i32
    %c0_i32_1 = arith.constant 0 : i32
    %c0_i32_2 = arith.constant 0 : i32
    return %c0_i32, %c0_i32_0, %c0_i32_1 : i32, i32, i32
  }
  func.func @transform_4(%arg0: i32) -> (i32, i32, i32) {
    %c0_i32 = arith.constant 0 : i32
    %c0_i32_0 = arith.constant 0 : i32
    %c0_i32_1 = arith.constant 0 : i32
    %c0_i32_2 = arith.constant 0 : i32
    return %c0_i32, %c0_i32_0, %c0_i32_1 : i32, i32, i32
  }
  func.func @transform_5(%arg0: i32) -> (i32, i32, i32) {
    %c0_i32 = arith.constant 0 : i32
    %c0_i32_0 = arith.constant 0 : i32
    %c0_i32_1 = arith.constant 0 : i32
    %c0_i32_2 = arith.constant 0 : i32
    return %c0_i32, %c0_i32_0, %c0_i32_1 : i32, i32, i32
  }
  func.func @transform_6(%arg0: i32) -> (i32, i32, i32) {
    %c0_i32 = arith.constant 0 : i32
    %c0_i32_0 = arith.constant 0 : i32
    %c0_i32_1 = arith.constant 0 : i32
    %c0_i32_2 = arith.constant 0 : i32
    return %c0_i32, %c0_i32_0, %c0_i32_1 : i32, i32, i32
  }
  func.func @transform_7(%arg0: i32) -> (i32, i32, i32) {
    %c0_i32 = arith.constant 0 : i32
    %c0_i32_0 = arith.constant 0 : i32
    %c0_i32_1 = arith.constant 0 : i32
    %c0_i32_2 = arith.constant 0 : i32
    return %c0_i32, %c0_i32_0, %c0_i32_1 : i32, i32, i32
  }
  func.func @transform_8(%arg0: i32) -> (i32, i32, i32) {
    %c0_i32 = arith.constant 0 : i32
    %c0_i32_0 = arith.constant 0 : i32
    %c0_i32_1 = arith.constant 0 : i32
    %c0_i32_2 = arith.constant 0 : i32
    return %c0_i32, %c0_i32_0, %c0_i32_1 : i32, i32, i32
  }
  func.func @transform_9(%arg0: i32) -> (i32, i32, i32) {
    %c0_i32 = arith.constant 0 : i32
    %c0_i32_0 = arith.constant 0 : i32
    %c0_i32_1 = arith.constant 0 : i32
    %c0_i32_2 = arith.constant 0 : i32
    return %c0_i32, %c0_i32_0, %c0_i32_1 : i32, i32, i32
  }
  func.func @transform_10(%arg0: i32) -> (i32, i32, i32) {
    %c0_i32 = arith.constant 0 : i32
    %c0_i32_0 = arith.constant 0 : i32
    %c0_i32_1 = arith.constant 0 : i32
    %c0_i32_2 = arith.constant 0 : i32
    return %c0_i32, %c0_i32_0, %c0_i32_1 : i32, i32, i32
  }
  func.func @transform_11(%arg0: i32) -> (i32, i32, i32) {
    %c0_i32 = arith.constant 0 : i32
    %c0_i32_0 = arith.constant 0 : i32
    %c0_i32_1 = arith.constant 0 : i32
    %c0_i32_2 = arith.constant 0 : i32
    return %c0_i32, %c0_i32_0, %c0_i32_1 : i32, i32, i32
  }
  func.func @transform_12(%arg0: i32) -> (i32, i32, i32) {
    %c0_i32 = arith.constant 0 : i32
    %c0_i32_0 = arith.constant 0 : i32
    %c0_i32_1 = arith.constant 0 : i32
    %c0_i32_2 = arith.constant 0 : i32
    return %c0_i32, %c0_i32_0, %c0_i32_1 : i32, i32, i32
  }
  func.func @transform_13(%arg0: i32) -> (i32, i32, i32) {
    %c0_i32 = arith.constant 0 : i32
    %c0_i32_0 = arith.constant 0 : i32
    %c0_i32_1 = arith.constant 0 : i32
    %c0_i32_2 = arith.constant 0 : i32
    return %c0_i32, %c0_i32_0, %c0_i32_1 : i32, i32, i32
  }
  func.func @transform_14(%arg0: i32) -> (i32, i32) {
    %c0_i32 = arith.constant 0 : i32
    %c0_i32_0 = arith.constant 0 : i32
    %c0_i32_1 = arith.constant 0 : i32
    return %c0_i32, %c0_i32_0 : i32, i32
  }
  func.func @transform_15(%arg0: i32) -> (i32, i32) {
    %c0_i32 = arith.constant 0 : i32
    %c0_i32_0 = arith.constant 0 : i32
    %c0_i32_1 = arith.constant 0 : i32
    return %c0_i32, %c0_i32_0 : i32, i32
  }
  func.func @transform_16(%arg0: i32) -> (i32, i32, i32) {
    %c0_i32 = arith.constant 0 : i32
    %c0_i32_0 = arith.constant 0 : i32
    %c0_i32_1 = arith.constant 0 : i32
    return %arg0, %c0_i32, %c0_i32_0 : i32, i32, i32
  }
}

</mosaic_0001>

<llo_original>
// kernel: fwd.1
$region0: #{fwd.1}
  #allocation0 [shape = 'u32[]', space=smem, size = 0x4, offset = 0x4, fixed_abs, tag = 'smem constant byte address 0x4 - core index']
  #allocation1 [shape = 'u32[144,128]{1,0:T(1,128)}', space=vmem, size = 0x12000, scoped, tag = 'internal scratch']
  %s0 = inlined_call_operand.vmem [shape: f32[2,8,32], index: 0, kind: input, shape index: {}]
  %s1 = inlined_call_operand.vmem [shape: f32[8,32], index: 1, kind: input, shape index: {}]
  %s2 = inlined_call_operand.vmem [shape: f32[6,1,32], index: 2, kind: input, shape index: {}]
  %s3 = inlined_call_operand.vmem [shape: f32[6,1,32], index: 3, kind: input, shape index: {}]
  %s4 = inlined_call_operand.vmem [shape: f32[6,32,96], index: 4, kind: input, shape index: {}]
  %s5 = inlined_call_operand.vmem [shape: f32[6,1,96], index: 5, kind: input, shape index: {}]
  %s6 = inlined_call_operand.vmem [shape: f32[6,32,32], index: 6, kind: input, shape index: {}]
  %s7 = inlined_call_operand.vmem [shape: f32[6,1,32], index: 7, kind: input, shape index: {}]
  %s8 = inlined_call_operand.vmem [shape: f32[6,1,32], index: 8, kind: input, shape index: {}]
  %s9 = inlined_call_operand.vmem [shape: f32[6,1,32], index: 9, kind: input, shape index: {}]
  %s10 = inlined_call_operand.vmem [shape: f32[6,32,128], index: 10, kind: input, shape index: {}]
  %s11 = inlined_call_operand.vmem [shape: f32[6,1,128], index: 11, kind: input, shape index: {}]
  %s12 = inlined_call_operand.vmem [shape: f32[6,128,32], index: 12, kind: input, shape index: {}]
  %s13 = inlined_call_operand.vmem [shape: f32[6,1,32], index: 13, kind: input, shape index: {}]
  %s14 = inlined_call_operand.vmem [shape: f32[1,32], index: 14, kind: input, shape index: {}]
  %s15 = inlined_call_operand.vmem [shape: f32[1,32], index: 15, kind: input, shape index: {}]
  %s16 = inlined_call_operand.hbm [shape: f32[2,8,32], index: 16, kind: output, shape index: {}]
  %s17 = sld [smem:[#allocation0]]
  $region104: #{fwd.1} parent=0
    _
  %s19 = ssub.s32 1, %s17
  %s20 = scalar_select 0, %s19, %s17
  $region1: #{fwd.1} parent=0
    #allocation2 [shape = 'u8[8192]{0}', space=vmem, size = 0x2000, scoped, tag = 'output window, operand 0']
    #allocation3 [shape = 's32[2]{0}', space=sflag, size = 0x8, scoped, tag = 'scoped memory for fwd.1']
    %21 = vsyncpa [#allocation3], 0
    %s22 = scalar_lea.sflag [#allocation3], 1
    %23 = vsyncpa %s22, 0
    loop: start=0, step=1, limit=4
    $region2: #{fwd.1} parent=1 // loop_pre_header
      _
    $region3: #{fwd.1} parent=1 // loop_header
      %s25 = sphi 0, %s29
      %p26 = scmp.ge.s32.totalorder %s25, 4
      %s35 = sphi 0, %s37
      %s38 = sphi 0, %s35
      %s39 = sphi 0, %s38
      %s55 = sphi 0, %s39
      %s59 = sphi 0, %s59
      %s61 = sphi 0, %s59
      %s62 = sphi 0, %s61
      %s76 = sphi 0, %s62
      %s80 = sphi 0, %s80
      %s82 = sphi 0, %s80
      %s83 = sphi 0, %s82
      %s97 = sphi 0, %s83
      %s101 = sphi 0, %s101
      %s103 = sphi 0, %s101
      %s104 = sphi 0, %s103
      %s118 = sphi 0, %s104
      %s122 = sphi 0, %s122
      %s124 = sphi 0, %s122
      %s125 = sphi 0, %s124
      %s139 = sphi 0, %s125
      %s143 = sphi 0, %s143
      %s145 = sphi 0, %s143
      %s146 = sphi 0, %s145
      %s160 = sphi 0, %s146
      %s164 = sphi 0, %s164
      %s166 = sphi 0, %s164
      %s167 = sphi 0, %s166
      %s181 = sphi 0, %s167
      %s185 = sphi 0, %s185
      %s187 = sphi 0, %s185
      %s188 = sphi 0, %s187
      %s202 = sphi 0, %s188
      %s206 = sphi 0, %s206
      %s208 = sphi 0, %s206
      %s209 = sphi 0, %s208
      %s223 = sphi 0, %s209
      %s227 = sphi 0, %s227
      %s229 = sphi 0, %s227
      %s230 = sphi 0, %s229
      %s244 = sphi 0, %s230
      %s248 = sphi 0, %s248
      %s250 = sphi 0, %s248
      %s251 = sphi 0, %s250
      %s265 = sphi 0, %s251
      %s269 = sphi 0, %s269
      %s271 = sphi 0, %s269
      %s272 = sphi 0, %s271
      %s286 = sphi 0, %s272
      %s290 = sphi 0, %s290
      %s292 = sphi 0, %s290
      %s293 = sphi 0, %s292
      %s307 = sphi 0, %s293
      %s311 = sphi 0, %s311
      %s313 = sphi 0, %s311
      %s314 = sphi 0, %s313
      %s328 = sphi 0, %s314
      %s332 = sphi 0, %s332
      %s334 = sphi 0, %s332
      %s335 = sphi 0, %s334
      %s349 = sphi 0, %s335
      %s353 = sphi 0, %s353
      %s355 = sphi 0, %s353
      %s356 = sphi 0, %s355
      %s370 = sphi 0, %s356
      %s376 = sphi 0, %s378
      %s379 = sphi 0, %s376
      %s380 = sphi 0, %s379
      %s396 = sphi 0, %s380
    $region4: #{fwd.1} parent=1 // loop_header_branch
      %28 = sbr.rel (%p26) target = $region8
    $region5: #{fwd.1} parent=1 // loop_body
      %s30 = ssub.s32 %s25, 1
      %s31 = ssub.s32 %s25, 2
      %s32 = sadd.s32 %s25, 1
      %s33 = ssub.s32 %s25, %s32
      %p34 = scmp.eq.s32.totalorder %s33, 0
      %s36 = sadd.s32 %s35, 1
      %s37 = scalar_select %p34, %s35, %s36
      %p40 = pneg %p34
      %p41 = scmp.eq.s32.totalorder %s25, 1
      %p42 = por %p40, %p41
      %p43 = scmp.ne.s32.totalorder %s35, %s38
      %p44 = scmp.eq.s32.totalorder %s25, 0
      %p45 = por %p43, %p44
      %p46 = scmp.ne.s32.totalorder %s35, %s38
      %p47 = scmp.eq.s32.totalorder %s30, 1
      %p48 = por %p46, %p47
      %p49 = scmp.ne.s32.totalorder %s38, %s39
      %p50 = scmp.eq.s32.totalorder %s30, 0
      %p51 = por %p49, %p50
      %p52 = scmp.ne.s32.totalorder %s38, %s39
      %p53 = scmp.eq.s32.totalorder %s31, 1
      %p54 = por %p52, %p53
      %p56 = scmp.ne.s32.totalorder %s39, %s55
      %p57 = scmp.eq.s32.totalorder %s31, 0
      %p58 = por %p56, %p57
      %s60 = sadd.s32 %s59, 1
      %p63 = scmp.eq.s32.totalorder %s25, 1
      %p64 = scmp.ne.s32.totalorder %s59, %s61
      %p65 = scmp.eq.s32.totalorder %s25, 0
      %p66 = por %p64, %p65
      %p67 = scmp.ne.s32.totalorder %s59, %s61
      %p68 = scmp.eq.s32.totalorder %s30, 1
      %p69 = por %p67, %p68
      %p70 = scmp.ne.s32.totalorder %s61, %s62
      %p71 = scmp.eq.s32.totalorder %s30, 0
      %p72 = por %p70, %p71
      %p73 = scmp.ne.s32.totalorder %s61, %s62
      %p74 = scmp.eq.s32.totalorder %s31, 1
      %p75 = por %p73, %p74
      %p77 = scmp.ne.s32.totalorder %s62, %s76
      %p78 = scmp.eq.s32.totalorder %s31, 0
      %p79 = por %p77, %p78
      %s81 = sadd.s32 %s80, 1
      %p84 = scmp.eq.s32.totalorder %s25, 1
      %p85 = scmp.ne.s32.totalorder %s80, %s82
      %p86 = scmp.eq.s32.totalorder %s25, 0
      %p87 = por %p85, %p86
      %p88 = scmp.ne.s32.totalorder %s80, %s82
      %p89 = scmp.eq.s32.totalorder %s30, 1
      %p90 = por %p88, %p89
      %p91 = scmp.ne.s32.totalorder %s82, %s83
      %p92 = scmp.eq.s32.totalorder %s30, 0
      %p93 = por %p91, %p92
      %p94 = scmp.ne.s32.totalorder %s82, %s83
      %p95 = scmp.eq.s32.totalorder %s31, 1
      %p96 = por %p94, %p95
      %p98 = scmp.ne.s32.totalorder %s83, %s97
      %p99 = scmp.eq.s32.totalorder %s31, 0
      %p100 = por %p98, %p99
      %s102 = sadd.s32 %s101, 1
      %p105 = scmp.eq.s32.totalorder %s25, 1
      %p106 = scmp.ne.s32.totalorder %s101, %s103
      %p107 = scmp.eq.s32.totalorder %s25, 0
      %p108 = por %p106, %p107
      %p109 = scmp.ne.s32.totalorder %s101, %s103
      %p110 = scmp.eq.s32.totalorder %s30, 1
      %p111 = por %p109, %p110
      %p112 = scmp.ne.s32.totalorder %s103, %s104
      %p113 = scmp.eq.s32.totalorder %s30, 0
      %p114 = por %p112, %p113
      %p115 = scmp.ne.s32.totalorder %s103, %s104
      %p116 = scmp.eq.s32.totalorder %s31, 1
      %p117 = por %p115, %p116
      %p119 = scmp.ne.s32.totalorder %s104, %s118
      %p120 = scmp.eq.s32.totalorder %s31, 0
      %p121 = por %p119, %p120
      %s123 = sadd.s32 %s122, 1
      %p126 = scmp.eq.s32.totalorder %s25, 1
      %p127 = scmp.ne.s32.totalorder %s122, %s124
      %p128 = scmp.eq.s32.totalorder %s25, 0
      %p129 = por %p127, %p128
      %p130 = scmp.ne.s32.totalorder %s122, %s124
      %p131 = scmp.eq.s32.totalorder %s30, 1
      %p132 = por %p130, %p131
      %p133 = scmp.ne.s32.totalorder %s124, %s125
      %p134 = scmp.eq.s32.totalorder %s30, 0
      %p135 = por %p133, %p134
      %p136 = scmp.ne.s32.totalorder %s124, %s125
      %p137 = scmp.eq.s32.totalorder %s31, 1
      %p138 = por %p136, %p137
      %p140 = scmp.ne.s32.totalorder %s125, %s139
      %p141 = scmp.eq.s32.totalorder %s31, 0
      %p142 = por %p140, %p141
      %s144 = sadd.s32 %s143, 1
      %p147 = scmp.eq.s32.totalorder %s25, 1
      %p148 = scmp.ne.s32.totalorder %s143, %s145
      %p149 = scmp.eq.s32.totalorder %s25, 0
      %p150 = por %p148, %p149
      %p151 = scmp.ne.s32.totalorder %s143, %s145
      %p152 = scmp.eq.s32.totalorder %s30, 1
      %p153 = por %p151, %p152
      %p154 = scmp.ne.s32.totalorder %s145, %s146
      %p155 = scmp.eq.s32.totalorder %s30, 0
      %p156 = por %p154, %p155
      %p157 = scmp.ne.s32.totalorder %s145, %s146
      %p158 = scmp.eq.s32.totalorder %s31, 1
      %p159 = por %p157, %p158
      %p161 = scmp.ne.s32.totalorder %s146, %s160
      %p162 = scmp.eq.s32.totalorder %s31, 0
      %p163 = por %p161, %p162
      %s165 = sadd.s32 %s164, 1
      %p168 = scmp.eq.s32.totalorder %s25, 1
      %p169 = scmp.ne.s32.totalorder %s164, %s166
      %p170 = scmp.eq.s32.totalorder %s25, 0
      %p171 = por %p169, %p170
      %p172 = scmp.ne.s32.totalorder %s164, %s166
      %p173 = scmp.eq.s32.totalorder %s30, 1
      %p174 = por %p172, %p173
      %p175 = scmp.ne.s32.totalorder %s166, %s167
      %p176 = scmp.eq.s32.totalorder %s30, 0
      %p177 = por %p175, %p176
      %p178 = scmp.ne.s32.totalorder %s166, %s167
      %p179 = scmp.eq.s32.totalorder %s31, 1
      %p180 = por %p178, %p179
      %p182 = scmp.ne.s32.totalorder %s167, %s181
      %p183 = scmp.eq.s32.totalorder %s31, 0
      %p184 = por %p182, %p183
      %s186 = sadd.s32 %s185, 1
      %p189 = scmp.eq.s32.totalorder %s25, 1
      %p190 = scmp.ne.s32.totalorder %s185, %s187
      %p191 = scmp.eq.s32.totalorder %s25, 0
      %p192 = por %p190, %p191
      %p193 = scmp.ne.s32.totalorder %s185, %s187
      %p194 = scmp.eq.s32.totalorder %s30, 1
      %p195 = por %p193, %p194
      %p196 = scmp.ne.s32.totalorder %s187, %s188
      %p197 = scmp.eq.s32.totalorder %s30, 0
      %p198 = por %p196, %p197
      %p199 = scmp.ne.s32.totalorder %s187, %s188
      %p200 = scmp.eq.s32.totalorder %s31, 1
      %p201 = por %p199, %p200
      %p203 = scmp.ne.s32.totalorder %s188, %s202
      %p204 = scmp.eq.s32.totalorder %s31, 0
      %p205 = por %p203, %p204
      %s207 = sadd.s32 %s206, 1
      %p210 = scmp.eq.s32.totalorder %s25, 1
      %p211 = scmp.ne.s32.totalorder %s206, %s208
      %p212 = scmp.eq.s32.totalorder %s25, 0
      %p213 = por %p211, %p212
      %p214 = scmp.ne.s32.totalorder %s206, %s208
      %p215 = scmp.eq.s32.totalorder %s30, 1
      %p216 = por %p214, %p215
      %p217 = scmp.ne.s32.totalorder %s208, %s209
      %p218 = scmp.eq.s32.totalorder %s30, 0
      %p219 = por %p217, %p218
      %p220 = scmp.ne.s32.totalorder %s208, %s209
      %p221 = scmp.eq.s32.totalorder %s31, 1
      %p222 = por %p220, %p221
      %p224 = scmp.ne.s32.totalorder %s209, %s223
      %p225 = scmp.eq.s32.totalorder %s31, 0
      %p226 = por %p224, %p225
      %s228 = sadd.s32 %s227, 1
      %p231 = scmp.eq.s32.totalorder %s25, 1
      %p232 = scmp.ne.s32.totalorder %s227, %s229
      %p233 = scmp.eq.s32.totalorder %s25, 0
      %p234 = por %p232, %p233
      %p235 = scmp.ne.s32.totalorder %s227, %s229
      %p236 = scmp.eq.s32.totalorder %s30, 1
      %p237 = por %p235, %p236
      %p238 = scmp.ne.s32.totalorder %s229, %s230
      %p239 = scmp.eq.s32.totalorder %s30, 0
      %p240 = por %p238, %p239
      %p241 = scmp.ne.s32.totalorder %s229, %s230
      %p242 = scmp.eq.s32.totalorder %s31, 1
      %p243 = por %p241, %p242
      %p245 = scmp.ne.s32.totalorder %s230, %s244
      %p246 = scmp.eq.s32.totalorder %s31, 0
      %p247 = por %p245, %p246
      %s249 = sadd.s32 %s248, 1
      %p252 = scmp.eq.s32.totalorder %s25, 1
      %p253 = scmp.ne.s32.totalorder %s248, %s250
      %p254 = scmp.eq.s32.totalorder %s25, 0
      %p255 = por %p253, %p254
      %p256 = scmp.ne.s32.totalorder %s248, %s250
      %p257 = scmp.eq.s32.totalorder %s30, 1
      %p258 = por %p256, %p257
      %p259 = scmp.ne.s32.totalorder %s250, %s251
      %p260 = scmp.eq.s32.totalorder %s30, 0
      %p261 = por %p259, %p260
      %p262 = scmp.ne.s32.totalorder %s250, %s251
      %p263 = scmp.eq.s32.totalorder %s31, 1
      %p264 = por %p262, %p263
      %p266 = scmp.ne.s32.totalorder %s251, %s265
      %p267 = scmp.eq.s32.totalorder %s31, 0
      %p268 = por %p266, %p267
      %s270 = sadd.s32 %s269, 1
      %p273 = scmp.eq.s32.totalorder %s25, 1
      %p274 = scmp.ne.s32.totalorder %s269, %s271
      %p275 = scmp.eq.s32.totalorder %s25, 0
      %p276 = por %p274, %p275
      %p277 = scmp.ne.s32.totalorder %s269, %s271
      %p278 = scmp.eq.s32.totalorder %s30, 1
      %p279 = por %p277, %p278
      %p280 = scmp.ne.s32.totalorder %s271, %s272
      %p281 = scmp.eq.s32.totalorder %s30, 0
      %p282 = por %p280, %p281
      %p283 = scmp.ne.s32.totalorder %s271, %s272
      %p284 = scmp.eq.s32.totalorder %s31, 1
      %p285 = por %p283, %p284
      %p287 = scmp.ne.s32.totalorder %s272, %s286
      %p288 = scmp.eq.s32.totalorder %s31, 0
      %p289 = por %p287, %p288
      %s291 = sadd.s32 %s290, 1
      %p294 = scmp.eq.s32.totalorder %s25, 1
      %p295 = scmp.ne.s32.totalorder %s290, %s292
      %p296 = scmp.eq.s32.totalorder %s25, 0
      %p297 = por %p295, %p296
      %p298 = scmp.ne.s32.totalorder %s290, %s292
      %p299 = scmp.eq.s32.totalorder %s30, 1
      %p300 = por %p298, %p299
      %p301 = scmp.ne.s32.totalorder %s292, %s293
      %p302 = scmp.eq.s32.totalorder %s30, 0
      %p303 = por %p301, %p302
      %p304 = scmp.ne.s32.totalorder %s292, %s293
      %p305 = scmp.eq.s32.totalorder %s31, 1
      %p306 = por %p304, %p305
      %p308 = scmp.ne.s32.totalorder %s293, %s307
      %p309 = scmp.eq.s32.totalorder %s31, 0
      %p310 = por %p308, %p309
      %s312 = sadd.s32 %s311, 1
      %p315 = scmp.eq.s32.totalorder %s25, 1
      %p316 = scmp.ne.s32.totalorder %s311, %s313
      %p317 = scmp.eq.s32.totalorder %s25, 0
      %p318 = por %p316, %p317
      %p319 = scmp.ne.s32.totalorder %s311, %s313
      %p320 = scmp.eq.s32.totalorder %s30, 1
      %p321 = por %p319, %p320
      %p322 = scmp.ne.s32.totalorder %s313, %s314
      %p323 = scmp.eq.s32.totalorder %s30, 0
      %p324 = por %p322, %p323
      %p325 = scmp.ne.s32.totalorder %s313, %s314
      %p326 = scmp.eq.s32.totalorder %s31, 1
      %p327 = por %p325, %p326
      %p329 = scmp.ne.s32.totalorder %s314, %s328
      %p330 = scmp.eq.s32.totalorder %s31, 0
      %p331 = por %p329, %p330
      %s333 = sadd.s32 %s332, 1
      %p336 = scmp.eq.s32.totalorder %s25, 1
      %p337 = scmp.ne.s32.totalorder %s332, %s334
      %p338 = scmp.eq.s32.totalorder %s25, 0
      %p339 = por %p337, %p338
      %p340 = scmp.ne.s32.totalorder %s332, %s334
      %p341 = scmp.eq.s32.totalorder %s30, 1
      %p342 = por %p340, %p341
      %p343 = scmp.ne.s32.totalorder %s334, %s335
      %p344 = scmp.eq.s32.totalorder %s30, 0
      %p345 = por %p343, %p344
      %p346 = scmp.ne.s32.totalorder %s334, %s335
      %p347 = scmp.eq.s32.totalorder %s31, 1
      %p348 = por %p346, %p347
      %p350 = scmp.ne.s32.totalorder %s335, %s349
      %p351 = scmp.eq.s32.totalorder %s31, 0
      %p352 = por %p350, %p351
      %s354 = sadd.s32 %s353, 1
      %p357 = scmp.eq.s32.totalorder %s25, 1
      %p358 = scmp.ne.s32.totalorder %s353, %s355
      %p359 = scmp.eq.s32.totalorder %s25, 0
      %p360 = por %p358, %p359
      %p361 = scmp.ne.s32.totalorder %s353, %s355
      %p362 = scmp.eq.s32.totalorder %s30, 1
      %p363 = por %p361, %p362
      %p364 = scmp.ne.s32.totalorder %s355, %s356
      %p365 = scmp.eq.s32.totalorder %s30, 0
      %p366 = por %p364, %p365
      %p367 = scmp.ne.s32.totalorder %s355, %s356
      %p368 = scmp.eq.s32.totalorder %s31, 1
      %p369 = por %p367, %p368
      %p371 = scmp.ne.s32.totalorder %s356, %s370
      %p372 = scmp.eq.s32.totalorder %s31, 0
      %p373 = por %p371, %p372
      %s374 = ssub.s32 %s25, %s32
      %p375 = scmp.eq.s32.totalorder %s374, 0
      %s377 = sadd.s32 %s376, 1
      %s378 = scalar_select %p375, %s376, %s377
      %p381 = pneg %p375
      %p382 = scmp.eq.s32.totalorder %s25, 1
      %p383 = por %p381, %p382
      %p384 = scmp.ne.s32.totalorder %s376, %s379
      %p385 = scmp.eq.s32.totalorder %s25, 0
      %p386 = por %p384, %p385
      %p387 = scmp.ne.s32.totalorder %s376, %s379
      %p388 = scmp.eq.s32.totalorder %s30, 1
      %p389 = por %p387, %p388
      %p390 = scmp.ne.s32.totalorder %s379, %s380
      %p391 = scmp.eq.s32.totalorder %s30, 0
      %p392 = por %p390, %p391
      %p393 = scmp.ne.s32.totalorder %s379, %s380
      %p394 = scmp.eq.s32.totalorder %s31, 1
      %p395 = por %p393, %p394
      %p397 = scmp.ne.s32.totalorder %s380, %s396
      %p398 = scmp.eq.s32.totalorder %s31, 0
      %p399 = por %p397, %p398
      %p400 = scmp.le.s32.totalorder 1, %s25
      %p401 = scmp.lt.s32.totalorder %s25, 3
      %p402 = pnand %p400, %p401
      %p403 = pneg %p402
      // Predicated region
      $region9: #{fwd.1} parent=5 // pred_check
        _
      $region10: #{fwd.1} parent=5 // pred_check_branch
        %405 = sbr.rel (%p402) target = $region12
      $region11: #{fwd.1} parent=5 // pred_region
        %s406 = ssub.s32 %s25, 1
        // Predicated region
        $region13: #{fwd.1} parent=11 // pred_check
          %p407 = pneg %p72
        $region14: #{fwd.1} parent=11 // pred_check_branch
          %409 = sbr.rel (%p407) target = $region16
        $region15: #{fwd.1} parent=11 // pred_region
          _
        $region16: #{fwd.1} parent=11 // pred_fallthru
          _
        // Predicated region
        $region17: #{fwd.1} parent=11 // pred_check
          %p410 = pneg %p93
        $region18: #{fwd.1} parent=11 // pred_check_branch
          %412 = sbr.rel (%p410) target = $region20
        $region19: #{fwd.1} parent=11 // pred_region
          _
        $region20: #{fwd.1} parent=11 // pred_fallthru
          _
        // Predicated region
        $region21: #{fwd.1} parent=11 // pred_check
          %p413 = pneg %p114
        $region22: #{fwd.1} parent=11 // pred_check_branch
          %415 = sbr.rel (%p413) target = $region24
        $region23: #{fwd.1} parent=11 // pred_region
          _
        $region24: #{fwd.1} parent=11 // pred_fallthru
          _
        // Predicated region
        $region25: #{fwd.1} parent=11 // pred_check
          %p416 = pneg %p135
        $region26: #{fwd.1} parent=11 // pred_check_branch
          %418 = sbr.rel (%p416) target = $region28
        $region27: #{fwd.1} parent=11 // pred_region
          _
        $region28: #{fwd.1} parent=11 // pred_fallthru
          _
        // Predicated region
        $region29: #{fwd.1} parent=11 // pred_check
          %p419 = pneg %p156
        $region30: #{fwd.1} parent=11 // pred_check_branch
          %421 = sbr.rel (%p419) target = $region32
        $region31: #{fwd.1} parent=11 // pred_region
          _
        $region32: #{fwd.1} parent=11 // pred_fallthru
          _
        // Predicated region
        $region33: #{fwd.1} parent=11 // pred_check
          %p422 = pneg %p177
        $region34: #{fwd.1} parent=11 // pred_check_branch
          %424 = sbr.rel (%p422) target = $region36
        $region35: #{fwd.1} parent=11 // pred_region
          _
        $region36: #{fwd.1} parent=11 // pred_fallthru
          _
        // Predicated region
        $region37: #{fwd.1} parent=11 // pred_check
          %p425 = pneg %p198
        $region38: #{fwd.1} parent=11 // pred_check_branch
          %427 = sbr.rel (%p425) target = $region40
        $region39: #{fwd.1} parent=11 // pred_region
          _
        $region40: #{fwd.1} parent=11 // pred_fallthru
          _
        // Predicated region
        $region41: #{fwd.1} parent=11 // pred_check
          %p428 = pneg %p219
        $region42: #{fwd.1} parent=11 // pred_check_branch
          %430 = sbr.rel (%p428) target = $region44
        $region43: #{fwd.1} parent=11 // pred_region
          _
        $region44: #{fwd.1} parent=11 // pred_fallthru
          _
        // Predicated region
        $region45: #{fwd.1} parent=11 // pred_check
          %p431 = pneg %p240
        $region46: #{fwd.1} parent=11 // pred_check_branch
          %433 = sbr.rel (%p431) target = $region48
        $region47: #{fwd.1} parent=11 // pred_region
          _
        $region48: #{fwd.1} parent=11 // pred_fallthru
          _
        // Predicated region
        $region49: #{fwd.1} parent=11 // pred_check
          %p434 = pneg %p261
        $region50: #{fwd.1} parent=11 // pred_check_branch
          %436 = sbr.rel (%p434) target = $region52
        $region51: #{fwd.1} parent=11 // pred_region
          _
        $region52: #{fwd.1} parent=11 // pred_fallthru
          _
        // Predicated region
        $region53: #{fwd.1} parent=11 // pred_check
          %p437 = pneg %p282
        $region54: #{fwd.1} parent=11 // pred_check_branch
          %439 = sbr.rel (%p437) target = $region56
        $region55: #{fwd.1} parent=11 // pred_region
          _
        $region56: #{fwd.1} parent=11 // pred_fallthru
          _
        // Predicated region
        $region57: #{fwd.1} parent=11 // pred_check
          %p440 = pneg %p303
        $region58: #{fwd.1} parent=11 // pred_check_branch
          %442 = sbr.rel (%p440) target = $region60
        $region59: #{fwd.1} parent=11 // pred_region
          _
        $region60: #{fwd.1} parent=11 // pred_fallthru
          _
        // Predicated region
        $region61: #{fwd.1} parent=11 // pred_check
          %p443 = pneg %p324
        $region62: #{fwd.1} parent=11 // pred_check_branch
          %445 = sbr.rel (%p443) target = $region64
        $region63: #{fwd.1} parent=11 // pred_region
          _
        $region64: #{fwd.1} parent=11 // pred_fallthru
          _
        // Predicated region
        $region65: #{fwd.1} parent=11 // pred_check
          %p446 = pneg %p345
        $region66: #{fwd.1} parent=11 // pred_check_branch
          %448 = sbr.rel (%p446) target = $region68
        $region67: #{fwd.1} parent=11 // pred_region
          _
        $region68: #{fwd.1} parent=11 // pred_fallthru
          _
        // Predicated region
        $region69: #{fwd.1} parent=11 // pred_check
          %p449 = pneg %p366
        $region70: #{fwd.1} parent=11 // pred_check_branch
          %451 = sbr.rel (%p449) target = $region72
        $region71: #{fwd.1} parent=11 // pred_region
          _
        $region72: #{fwd.1} parent=11 // pred_fallthru
          _
      $region12: #{fwd.1} parent=5 // pred_fallthru
        _
      %p452 = scmp.lt.s32.totalorder %s25, 2
      // Predicated region
      $region73: #{fwd.1} parent=5 // pred_check
        %p453 = pneg %p452
      $region74: #{fwd.1} parent=5 // pred_check_branch
        %455 = sbr.rel (%p453) target = $region76
      $region75: #{fwd.1} parent=5 // pred_region
        // Predicated region
        $region77: #{fwd.1} parent=75 // pred_check
          %p456 = pneg %p45
        $region78: #{fwd.1} parent=75 // pred_check_branch
          %458 = sbr.rel (%p456) target = $region80
        $region79: #{fwd.1} parent=75 // pred_region
          %p459 = scmp.lt.s32.totalorder %s25, 1
          %s460 = scalar_select %p459, %s25, 1
          %s461 = smul.addr %s460, 8
          %s462 = scalar_lea.vmem %s0, %s461
        $region80: #{fwd.1} parent=75 // pred_fallthru
          _
      $region76: #{fwd.1} parent=5 // pred_fallthru
        _
      %p463 = scmp.le.s32.totalorder 1, %s25
      %p464 = scmp.lt.s32.totalorder %s25, 3
      %p465 = pnand %p463, %p464
      %p466 = pneg %p465
      // Predicated region
      $region81: #{fwd.1} parent=5 // pred_check
        _
      $region82: #{fwd.1} parent=5 // pred_check_branch
        %468 = sbr.rel (%p465) target = $region84
      $region83: #{fwd.1} parent=5 // pred_region
        %s469 = ssub.s32 %s25, 1
        %p470 = scmp.lt.s32.totalorder %s30, 1
        %s471 = scalar_select %p470, %s30, 1
        %s472 = smul.addr %s471, 8
        %s473 = scalar_lea.vmem %s0, %s472
        %p474 = pneg %p51
        %p475 = pneg %p48
        %p476 = pneg %p72
        %p477 = pneg %p69
        %p478 = pneg %p93
        %p479 = pneg %p90
        %p480 = pneg %p114
        %p481 = pneg %p111
        %p482 = pneg %p135
        %p483 = pneg %p132
        %p484 = pneg %p156
        %p485 = pneg %p153
        %p486 = pneg %p177
        %p487 = pneg %p174
        %p488 = pneg %p198
        %p489 = pneg %p195
        %p490 = pneg %p219
        %p491 = pneg %p216
        %p492 = pneg %p240
        %p493 = pneg %p237
        %p494 = pneg %p261
        %p495 = pneg %p258
        %p496 = pneg %p282
        %p497 = pneg %p279
        %p498 = pneg %p303
        %p499 = pneg %p300
        %p500 = pneg %p324
        %p501 = pneg %p321
        %p502 = pneg %p345
        %p503 = pneg %p342
        %p504 = pneg %p366
        %p505 = pneg %p363
        %p506 = pneg %p392
        %p507 = pneg %p389
        %s508 = sand.u32 %s379, 1
        %s509 = scalar_lea.sflag [#allocation3], %s508
        %s510 = sand.u32 %s379, 1
        %s511 = smul.addr %s510, 8
        %s512 = scalar_lea.vmem [#allocation2], %s511
        %p513 = scmp.lt.s32.totalorder %s30, 1
        %s514 = scalar_select %p513, %s30, 1
        %s515 = smul.addr %s514, 8
        %s516 = scalar_lea.vmem %s0, %s515
        %v517 = vld [vmem:[%s516] sm:$0xff]
        %v518 = vld [vmem:[%s1] sm:$0xff]
        %v519 = vadd.f32 %v517, %v518
        %v520 = vlaneseq
        %v521 = vshrl.u32 %v520, 7
        %v522 = vlaneseq
        %v523 = vand.u32 %v522, 127
        %vm524 = vcmp.le.s32.totalorder %v523, %v521
        %v525 = vsel %vm524, 0.0, -1e+30
        loop: start=0, step=1, limit=6
        $region85: #{fwd.1} parent=83 // loop_pre_header
          _
        $region86: #{fwd.1} parent=83 // loop_header
          %s527 = sphi 0, %s531
          %p528 = scmp.ge.s32.totalorder %s527, 6
          %v532 = vphi %v519, %v1645
        $region87: #{fwd.1} parent=83 // loop_header_branch
          %530 = sbr.rel (%p528) target = $region91
        $region88: #{fwd.1} parent=83 // loop_body
          %s533 = scalar_lea.vmem %s2, %s527
          %v534 = vld [vmem:[%s533] sm:$0x1]
          %s535 = scalar_lea.vmem %s3, %s527
          %v536 = vld [vmem:[%s535] sm:$0x1]
          %vm537 = vcmask 261120
          %v538 = vsel %vm537, %v532, 0.0
          %539 = vadd.xlane.f32.xlu0 %v538
          %v540 = vpop.xlane.xlu0 %539
          %v541 = vrcp.pop 32.0
          %v542 = vmul.f32 %v540, %v541
          %v543 = vmul.f32 %v532, %v532
          %v544 = vsel %vm537, %v543, 0.0
          %545 = vadd.xlane.f32.xlu0 %v544
          %v546 = vpop.xlane.xlu0 %545
          %v547 = vmul.f32 %v546, %v541
          %v548 = vmul.f32 %v542, %v542
          %v549 = vsub.f32 %v547, %v548
          %v550 = vsub.f32 %v532, %v542
          %v551 = vadd.f32 %v549, 1e-05
          %v552 = vrsqrt.pop %v551
          %v553 = vmul.f32 %v550, %v552
          %v555 = vlaneseq
          %v556 = vshrl.u32 %v555, 7
          %v557 = vsub.s32 0, %v556
          %v558 = vrot.slane %v534, %v557
          %v560 = vmul.f32 %v553, %v558
          %v562 = vlaneseq
          %v563 = vshrl.u32 %v562, 7
          %v564 = vsub.s32 0, %v563
          %v565 = vrot.slane %v536, %v564
          %v567 = vadd.f32 %v560, %v565
          %s568 = smul.u32 %s527, 32
          %s569 = scalar_lea.vmem %s4, %s568
          %v570 = vld [vmem:[%s569] sm:$0xff]
          %v571 = vld [vmem:[%s569 + $0x8] sm:$0xff]
          %v572 = vld [vmem:[%s569 + $0x10] sm:$0xff]
          %v573 = vld [vmem:[%s569 + $0x18] sm:$0xff]
          %s574 = scalar_lea.vmem %s5, %s527
          %v575 = vld [vmem:[%s574] sm:$0x1]
          %v577 = vlaneseq
          %v578 = vshrl.u32 %v577, 7
          %v579 = vsub.s32 0, %v578
          %v580 = vrot.slane %v575, %v579
          %v583 = vsel %vm537, %v567, 0
          %585 = vmatprep.subr.mxu0 0.0
          %586 = vmatpush1.msra.mxu0 0.0
          %587 = vmatprep.subr.mxu0 0.0
          %588 = vmatpush1.msra.mxu0 0.0
          %589 = vmatprep.subr.mxu0 0.0
          %590 = vmatpush1.msra.mxu0 0.0
          %591 = vmatprep.subr.mxu0 0.0
          %592 = vmatpush1.msra.mxu0 0.0
          %593 = vmatprep.subr.mxu0 0.0
          %594 = vmatpush1.msra.mxu0 0.0
          %595 = vmatprep.subr.mxu0 0.0
          %596 = vmatpush1.msra.mxu0 0.0
          %597 = vmatprep.subr.mxu0 0.0
          %598 = vmatpush1.msra.mxu0 0.0
          %599 = vmatprep.subr.mxu0 0.0
          %600 = vmatpush1.msra.mxu0 0.0
          %601 = vmatprep.subr.mxu0 0.0
          %602 = vmatpush1.msra.mxu0 0.0
          %603 = vmatprep.subr.mxu0 0.0
          %604 = vmatpush1.msra.mxu0 0.0
          %605 = vmatprep.subr.mxu0 0.0
          %606 = vmatpush1.msra.mxu0 0.0
          %607 = vmatprep.subr.mxu0 0.0
          %608 = vmatpush1.msra.mxu0 0.0
          %609 = vmatprep.subr.mxu0 0.0
          %610 = vmatpush1.msra.mxu0 %v573
          %611 = vmatprep.subr.mxu0 0.0
          %612 = vmatpush1.msra.mxu0 %v572
          %613 = vmatprep.subr.mxu0 0.0
          %614 = vmatpush1.msra.mxu0 %v571
          %615 = vmatprep.subr.mxu0 0.0
          %616 = vmatpush1.msra.mxu0 %v570
          %617 = vmatprep.subr.mxu0 0.0
          %618 = vmatpush2.msra.mxu0 0.0
          %619 = vmatprep.subr.mxu0 0.0
          %620 = vmatpush2.msra.mxu0 0.0
          %621 = vmatprep.subr.mxu0 0.0
          %622 = vmatpush2.msra.mxu0 0.0
          %623 = vmatprep.subr.mxu0 0.0
          %624 = vmatpush2.msra.mxu0 0.0
          %625 = vmatprep.subr.mxu0 0.0
          %626 = vmatpush2.msra.mxu0 0.0
          %627 = vmatprep.subr.mxu0 0.0
          %628 = vmatpush2.msra.mxu0 0.0
          %629 = vmatprep.subr.mxu0 0.0
          %630 = vmatpush2.msra.mxu0 0.0
          %631 = vmatprep.subr.mxu0 0.0
          %632 = vmatpush2.msra.mxu0 0.0
          %633 = vmatprep.subr.mxu0 0.0
          %634 = vmatpush2.msra.mxu0 0.0
          %635 = vmatprep.subr.mxu0 0.0
          %636 = vmatpush2.msra.mxu0 0.0
          %637 = vmatprep.subr.mxu0 0.0
          %638 = vmatpush2.msra.mxu0 0.0
          %639 = vmatprep.subr.mxu0 0.0
          %640 = vmatpush2.msra.mxu0 0.0
          %641 = vmatprep.subr.mxu0 0.0
          %642 = vmatpush2.msra.mxu0 0.0
          %643 = vmatprep.subr.mxu0 0.0
          %644 = vmatpush2.msra.mxu0 0.0
          %645 = vmatprep.subr.mxu0 0.0
          %646 = vmatpush2.msra.mxu0 0.0
          %647 = vmatprep.subr.mxu0 0.0
          %648 = vmatpush2.msra.mxu0 0.0
          %649 = vmatprep.mubr.f32.mxu0 0.0
          %650 = vmatmul.mubr.f32.gmra.mxu0 %v583
          %v651 = vpop.f32.mrf.mxu0
          %v652 = vadd.f32 %v580, %v651
          %v653 = vpop.f32.mrf.mxu0
          %654 = vdwg.mxu0
          %656 = vrot.lane.b32.xlu0 %v652, 96
          %v657 = vpop.permute.xlu0 %656
          %vm658 = vcmask 64512
          %v659 = vsel %vm658, %v652, 0
          %v661 = vsel %vm658, %v657, 0
          %663 = vmatprep.subr.mxu0 0.0
          %664 = vmatpush1.xpose.msra.mxu0 0.0
          %665 = vmatprep.subr.mxu0 0.0
          %666 = vmatpush1.xpose.msra.mxu0 0.0
          %667 = vmatprep.subr.mxu0 0.0
          %668 = vmatpush1.xpose.msra.mxu0 0.0
          %669 = vmatprep.subr.mxu0 0.0
          %670 = vmatpush1.xpose.msra.mxu0 0.0
          %671 = vmatprep.subr.mxu0 0.0
          %672 = vmatpush1.xpose.msra.mxu0 0.0
          %673 = vmatprep.subr.mxu0 0.0
          %674 = vmatpush1.xpose.msra.mxu0 0.0
          %675 = vmatprep.subr.mxu0 0.0
          %676 = vmatpush1.xpose.msra.mxu0 0.0
          %677 = vmatprep.subr.mxu0 0.0
          %678 = vmatpush1.xpose.msra.mxu0 0.0
          %679 = vmatprep.subr.mxu0 0.0
          %680 = vmatpush1.xpose.msra.mxu0 0.0
          %681 = vmatprep.subr.mxu0 0.0
          %682 = vmatpush1.xpose.msra.mxu0 0.0
          %683 = vmatprep.subr.mxu0 0.0
          %684 = vmatpush1.xpose.msra.mxu0 0.0
          %685 = vmatprep.subr.mxu0 0.0
          %686 = vmatpush1.xpose.msra.mxu0 0.0
          %687 = vmatprep.subr.mxu0 0.0
          %688 = vmatpush1.xpose.msra.mxu0 0.0
          %689 = vmatprep.subr.mxu0 0.0
          %690 = vmatpush1.xpose.msra.mxu0 0.0
          %691 = vmatprep.subr.mxu0 0.0
          %692 = vmatpush1.xpose.msra.mxu0 0.0
          %693 = vmatprep.subr.mxu0 0.0
          %694 = vmatpush1.xpose.msra.mxu0 %v661
          %695 = vmatprep.subr.mxu0 0.0
          %696 = vmatpush2.xpose.msra.mxu0 0.0
          %697 = vmatprep.subr.mxu0 0.0
          %698 = vmatpush2.xpose.msra.mxu0 0.0
          %699 = vmatprep.subr.mxu0 0.0
          %700 = vmatpush2.xpose.msra.mxu0 0.0
          %701 = vmatprep.subr.mxu0 0.0
          %702 = vmatpush2.xpose.msra.mxu0 0.0
          %703 = vmatprep.subr.mxu0 0.0
          %704 = vmatpush2.xpose.msra.mxu0 0.0
          %705 = vmatprep.subr.mxu0 0.0
          %706 = vmatpush2.xpose.msra.mxu0 0.0
          %707 = vmatprep.subr.mxu0 0.0
          %708 = vmatpush2.xpose.msra.mxu0 0.0
          %709 = vmatprep.subr.mxu0 0.0
          %710 = vmatpush2.xpose.msra.mxu0 0.0
          %711 = vmatprep.subr.mxu0 0.0
          %712 = vmatpush2.xpose.msra.mxu0 0.0
          %713 = vmatprep.subr.mxu0 0.0
          %714 = vmatpush2.xpose.msra.mxu0 0.0
          %715 = vmatprep.subr.mxu0 0.0
          %716 = vmatpush2.xpose.msra.mxu0 0.0
          %717 = vmatprep.subr.mxu0 0.0
          %718 = vmatpush2.xpose.msra.mxu0 0.0
          %719 = vmatprep.subr.mxu0 0.0
          %720 = vmatpush2.xpose.msra.mxu0 0.0
          %721 = vmatprep.subr.mxu0 0.0
          %722 = vmatpush2.xpose.msra.mxu0 0.0
          %723 = vmatprep.subr.mxu0 0.0
          %724 = vmatpush2.xpose.msra.mxu0 0.0
          %725 = vmatprep.subr.mxu0 0.0
          %726 = vmatpush2.xpose.msra.mxu0 0.0
          %727 = vmatprep.mubr.f32.mxu0 0.0
          %728 = vmatmul.mubr.f32.gmra.mxu0 %v659
          %v729 = vpop.f32.mrf.mxu0
          %v730 = vadd.f32 %v525, %v729
          %v731 = vpop.f32.mrf.mxu0
          %732 = vdwg.mxu0
          %v733 = vsel %vm658, %v730, -inf
          %734 = vmax.xlane.f32.xlu0 %v733
          %v735 = vpop.xlane.xlu0 %734
          %v736 = vsub.f32 %v730, %v735
          %v737 = vmul.f32 %v736, 1.442695
          %v738 = vpow.pop %v737
          %v739 = vsel %vm658, %v738, 0.0
          %740 = vadd.xlane.f32.xlu0 %v739
          %v741 = vpop.xlane.xlu0 %740
          %v742 = vrcp.pop %v741
          %v743 = vmul.f32 %v738, %v742
          %744 = vrot.lane.b32.xlu0 %v652, 64
          %v745 = vpop.permute.xlu0 %744
          %v748 = vsel %vm658, %v743, 0
          %750 = vmatprep.subr.mxu0 0.0
          %751 = vmatpush1.msra.mxu0 0.0
          %752 = vmatprep.subr.mxu0 0.0
          %753 = vmatpush1.msra.mxu0 0.0
          %754 = vmatprep.subr.mxu0 0.0
          %755 = vmatpush1.msra.mxu0 0.0
          %756 = vmatprep.subr.mxu0 0.0
          %757 = vmatpush1.msra.mxu0 0.0
          %758 = vmatprep.subr.mxu0 0.0
          %759 = vmatpush1.msra.mxu0 0.0
          %760 = vmatprep.subr.mxu0 0.0
          %761 = vmatpush1.msra.mxu0 0.0
          %762 = vmatprep.subr.mxu0 0.0
          %763 = vmatpush1.msra.mxu0 0.0
          %764 = vmatprep.subr.mxu0 0.0
          %765 = vmatpush1.msra.mxu0 0.0
          %766 = vmatprep.subr.mxu0 0.0
          %767 = vmatpush1.msra.mxu0 0.0
          %768 = vmatprep.subr.mxu0 0.0
          %769 = vmatpush1.msra.mxu0 0.0
          %770 = vmatprep.subr.mxu0 0.0
          %771 = vmatpush1.msra.mxu0 0.0
          %772 = vmatprep.subr.mxu0 0.0
          %773 = vmatpush1.msra.mxu0 0.0
          %774 = vmatprep.subr.mxu0 0.0
          %775 = vmatpush1.msra.mxu0 0.0
          %776 = vmatprep.subr.mxu0 0.0
          %777 = vmatpush1.msra.mxu0 0.0
          %778 = vmatprep.subr.mxu0 0.0
          %779 = vmatpush1.msra.mxu0 0.0
          %780 = vmatprep.subr.mxu0 0.0
          %781 = vmatpush1.msra.mxu0 %v745
          %782 = vmatprep.subr.mxu0 0.0
          %783 = vmatpush2.msra.mxu0 0.0
          %784 = vmatprep.subr.mxu0 0.0
          %785 = vmatpush2.msra.mxu0 0.0
          %786 = vmatprep.subr.mxu0 0.0
          %787 = vmatpush2.msra.mxu0 0.0
          %788 = vmatprep.subr.mxu0 0.0
          %789 = vmatpush2.msra.mxu0 0.0
          %790 = vmatprep.subr.mxu0 0.0
          %791 = vmatpush2.msra.mxu0 0.0
          %792 = vmatprep.subr.mxu0 0.0
          %793 = vmatpush2.msra.mxu0 0.0
          %794 = vmatprep.subr.mxu0 0.0
          %795 = vmatpush2.msra.mxu0 0.0
          %796 = vmatprep.subr.mxu0 0.0
          %797 = vmatpush2.msra.mxu0 0.0
          %798 = vmatprep.subr.mxu0 0.0
          %799 = vmatpush2.msra.mxu0 0.0
          %800 = vmatprep.subr.mxu0 0.0
          %801 = vmatpush2.msra.mxu0 0.0
          %802 = vmatprep.subr.mxu0 0.0
          %803 = vmatpush2.msra.mxu0 0.0
          %804 = vmatprep.subr.mxu0 0.0
          %805 = vmatpush2.msra.mxu0 0.0
          %806 = vmatprep.subr.mxu0 0.0
          %807 = vmatpush2.msra.mxu0 0.0
          %808 = vmatprep.subr.mxu0 0.0
          %809 = vmatpush2.msra.mxu0 0.0
          %810 = vmatprep.subr.mxu0 0.0
          %811 = vmatpush2.msra.mxu0 0.0
          %812 = vmatprep.subr.mxu0 0.0
          %813 = vmatpush2.msra.mxu0 0.0
          %814 = vmatprep.mubr.f32.mxu0 0.0
          %815 = vmatmul.mubr.f32.gmra.mxu0 %v748
          %v816 = vpop.f32.mrf.mxu0
          %v817 = vadd.f32 0.0, %v816
          %v818 = vpop.f32.mrf.mxu0
          %819 = vdwg.mxu0
          %820 = vrot.lane.b32.xlu0 %v652, 120
          %v821 = vpop.permute.xlu0 %820
          %822 = vrot.lane.b32.xlu0 %v652, 88
          %v823 = vpop.permute.xlu0 %822
          %v824 = vsel %vm658, %v821, 0
          %v826 = vsel %vm658, %v823, 0
          %828 = vmatprep.subr.mxu0 0.0
          %829 = vmatpush1.xpose.msra.mxu0 0.0
          %830 = vmatprep.subr.mxu0 0.0
          %831 = vmatpush1.xpose.msra.mxu0 0.0
          %832 = vmatprep.subr.mxu0 0.0
          %833 = vmatpush1.xpose.msra.mxu0 0.0
          %834 = vmatprep.subr.mxu0 0.0
          %835 = vmatpush1.xpose.msra.mxu0 0.0
          %836 = vmatprep.subr.mxu0 0.0
          %837 = vmatpush1.xpose.msra.mxu0 0.0
          %838 = vmatprep.subr.mxu0 0.0
          %839 = vmatpush1.xpose.msra.mxu0 0.0
          %840 = vmatprep.subr.mxu0 0.0
          %841 = vmatpush1.xpose.msra.mxu0 0.0
          %842 = vmatprep.subr.mxu0 0.0
          %843 = vmatpush1.xpose.msra.mxu0 0.0
          %844 = vmatprep.subr.mxu0 0.0
          %845 = vmatpush1.xpose.msra.mxu0 0.0
          %846 = vmatprep.subr.mxu0 0.0
          %847 = vmatpush1.xpose.msra.mxu0 0.0
          %848 = vmatprep.subr.mxu0 0.0
          %849 = vmatpush1.xpose.msra.mxu0 0.0
          %850 = vmatprep.subr.mxu0 0.0
          %851 = vmatpush1.xpose.msra.mxu0 0.0
          %852 = vmatprep.subr.mxu0 0.0
          %853 = vmatpush1.xpose.msra.mxu0 0.0
          %854 = vmatprep.subr.mxu0 0.0
          %855 = vmatpush1.xpose.msra.mxu0 0.0
          %856 = vmatprep.subr.mxu0 0.0
          %857 = vmatpush1.xpose.msra.mxu0 0.0
          %858 = vmatprep.subr.mxu0 0.0
          %859 = vmatpush1.xpose.msra.mxu0 %v826
          %860 = vmatprep.subr.mxu0 0.0
          %861 = vmatpush2.xpose.msra.mxu0 0.0
          %862 = vmatprep.subr.mxu0 0.0
          %863 = vmatpush2.xpose.msra.mxu0 0.0
          %864 = vmatprep.subr.mxu0 0.0
          %865 = vmatpush2.xpose.msra.mxu0 0.0
          %866 = vmatprep.subr.mxu0 0.0
          %867 = vmatpush2.xpose.msra.mxu0 0.0
          %868 = vmatprep.subr.mxu0 0.0
          %869 = vmatpush2.xpose.msra.mxu0 0.0
          %870 = vmatprep.subr.mxu0 0.0
          %871 = vmatpush2.xpose.msra.mxu0 0.0
          %872 = vmatprep.subr.mxu0 0.0
          %873 = vmatpush2.xpose.msra.mxu0 0.0
          %874 = vmatprep.subr.mxu0 0.0
          %875 = vmatpush2.xpose.msra.mxu0 0.0
          %876 = vmatprep.subr.mxu0 0.0
          %877 = vmatpush2.xpose.msra.mxu0 0.0
          %878 = vmatprep.subr.mxu0 0.0
          %879 = vmatpush2.xpose.msra.mxu0 0.0
          %880 = vmatprep.subr.mxu0 0.0
          %881 = vmatpush2.xpose.msra.mxu0 0.0
          %882 = vmatprep.subr.mxu0 0.0
          %883 = vmatpush2.xpose.msra.mxu0 0.0
          %884 = vmatprep.subr.mxu0 0.0
          %885 = vmatpush2.xpose.msra.mxu0 0.0
          %886 = vmatprep.subr.mxu0 0.0
          %887 = vmatpush2.xpose.msra.mxu0 0.0
          %888 = vmatprep.subr.mxu0 0.0
          %889 = vmatpush2.xpose.msra.mxu0 0.0
          %890 = vmatprep.subr.mxu0 0.0
          %891 = vmatpush2.xpose.msra.mxu0 0.0
          %892 = vmatprep.mubr.f32.mxu0 0.0
          %893 = vmatmul.mubr.f32.gmra.mxu0 %v824
          %v894 = vpop.f32.mrf.mxu0
          %v895 = vadd.f32 %v525, %v894
          %v896 = vpop.f32.mrf.mxu0
          %897 = vdwg.mxu0
          %v898 = vsel %vm658, %v895, -inf
          %899 = vmax.xlane.f32.xlu0 %v898
          %v900 = vpop.xlane.xlu0 %899
          %v901 = vsub.f32 %v895, %v900
          %v902 = vmul.f32 %v901, 1.442695
          %v903 = vpow.pop %v902
          %v904 = vsel %vm658, %v903, 0.0
          %905 = vadd.xlane.f32.xlu0 %v904
          %v906 = vpop.xlane.xlu0 %905
          %v907 = vrcp.pop %v906
          %v908 = vmul.f32 %v903, %v907
          %909 = vrot.lane.b32.xlu0 %v652, 56
          %v910 = vpop.permute.xlu0 %909
          %v913 = vsel %vm658, %v908, 0
          %915 = vmatprep.subr.mxu0 0.0
          %916 = vmatpush1.msra.mxu0 0.0
          %917 = vmatprep.subr.mxu0 0.0
          %918 = vmatpush1.msra.mxu0 0.0
          %919 = vmatprep.subr.mxu0 0.0
          %920 = vmatpush1.msra.mxu0 0.0
          %921 = vmatprep.subr.mxu0 0.0
          %922 = vmatpush1.msra.mxu0 0.0
          %923 = vmatprep.subr.mxu0 0.0
          %924 = vmatpush1.msra.mxu0 0.0
          %925 = vmatprep.subr.mxu0 0.0
          %926 = vmatpush1.msra.mxu0 0.0
          %927 = vmatprep.subr.mxu0 0.0
          %928 = vmatpush1.msra.mxu0 0.0
          %929 = vmatprep.subr.mxu0 0.0
          %930 = vmatpush1.msra.mxu0 0.0
          %931 = vmatprep.subr.mxu0 0.0
          %932 = vmatpush1.msra.mxu0 0.0
          %933 = vmatprep.subr.mxu0 0.0
          %934 = vmatpush1.msra.mxu0 0.0
          %935 = vmatprep.subr.mxu0 0.0
          %936 = vmatpush1.msra.mxu0 0.0
          %937 = vmatprep.subr.mxu0 0.0
          %938 = vmatpush1.msra.mxu0 0.0
          %939 = vmatprep.subr.mxu0 0.0
          %940 = vmatpush1.msra.mxu0 0.0
          %941 = vmatprep.subr.mxu0 0.0
          %942 = vmatpush1.msra.mxu0 0.0
          %943 = vmatprep.subr.mxu0 0.0
          %944 = vmatpush1.msra.mxu0 0.0
          %945 = vmatprep.subr.mxu0 0.0
          %946 = vmatpush1.msra.mxu0 %v910
          %947 = vmatprep.subr.mxu0 0.0
          %948 = vmatpush2.msra.mxu0 0.0
          %949 = vmatprep.subr.mxu0 0.0
          %950 = vmatpush2.msra.mxu0 0.0
          %951 = vmatprep.subr.mxu0 0.0
          %952 = vmatpush2.msra.mxu0 0.0
          %953 = vmatprep.subr.mxu0 0.0
          %954 = vmatpush2.msra.mxu0 0.0
          %955 = vmatprep.subr.mxu0 0.0
          %956 = vmatpush2.msra.mxu0 0.0
          %957 = vmatprep.subr.mxu0 0.0
          %958 = vmatpush2.msra.mxu0 0.0
          %959 = vmatprep.subr.mxu0 0.0
          %960 = vmatpush2.msra.mxu0 0.0
          %961 = vmatprep.subr.mxu0 0.0
          %962 = vmatpush2.msra.mxu0 0.0
          %963 = vmatprep.subr.mxu0 0.0
          %964 = vmatpush2.msra.mxu0 0.0
          %965 = vmatprep.subr.mxu0 0.0
          %966 = vmatpush2.msra.mxu0 0.0
          %967 = vmatprep.subr.mxu0 0.0
          %968 = vmatpush2.msra.mxu0 0.0
          %969 = vmatprep.subr.mxu0 0.0
          %970 = vmatpush2.msra.mxu0 0.0
          %971 = vmatprep.subr.mxu0 0.0
          %972 = vmatpush2.msra.mxu0 0.0
          %973 = vmatprep.subr.mxu0 0.0
          %974 = vmatpush2.msra.mxu0 0.0
          %975 = vmatprep.subr.mxu0 0.0
          %976 = vmatpush2.msra.mxu0 0.0
          %977 = vmatprep.subr.mxu0 0.0
          %978 = vmatpush2.msra.mxu0 0.0
          %979 = vmatprep.mubr.f32.mxu0 0.0
          %980 = vmatmul.mubr.f32.gmra.mxu0 %v913
          %v981 = vpop.f32.mrf.mxu0
          %v982 = vadd.f32 0.0, %v981
          %v983 = vpop.f32.mrf.mxu0
          %984 = vdwg.mxu0
          %985 = vrot.lane.b32.xlu0 %v652, 112
          %v986 = vpop.permute.xlu0 %985
          %987 = vrot.lane.b32.xlu0 %v652, 80
          %v988 = vpop.permute.xlu0 %987
          %v989 = vsel %vm658, %v986, 0
          %v991 = vsel %vm658, %v988, 0
          %993 = vmatprep.subr.mxu0 0.0
          %994 = vmatpush1.xpose.msra.mxu0 0.0
          %995 = vmatprep.subr.mxu0 0.0
          %996 = vmatpush1.xpose.msra.mxu0 0.0
          %997 = vmatprep.subr.mxu0 0.0
          %998 = vmatpush1.xpose.msra.mxu0 0.0
          %999 = vmatprep.subr.mxu0 0.0
          %1000 = vmatpush1.xpose.msra.mxu0 0.0
          %1001 = vmatprep.subr.mxu0 0.0
          %1002 = vmatpush1.xpose.msra.mxu0 0.0
          %1003 = vmatprep.subr.mxu0 0.0
          %1004 = vmatpush1.xpose.msra.mxu0 0.0
          %1005 = vmatprep.subr.mxu0 0.0
          %1006 = vmatpush1.xpose.msra.mxu0 0.0
          %1007 = vmatprep.subr.mxu0 0.0
          %1008 = vmatpush1.xpose.msra.mxu0 0.0
          %1009 = vmatprep.subr.mxu0 0.0
          %1010 = vmatpush1.xpose.msra.mxu0 0.0
          %1011 = vmatprep.subr.mxu0 0.0
          %1012 = vmatpush1.xpose.msra.mxu0 0.0
          %1013 = vmatprep.subr.mxu0 0.0
          %1014 = vmatpush1.xpose.msra.mxu0 0.0
          %1015 = vmatprep.subr.mxu0 0.0
          %1016 = vmatpush1.xpose.msra.mxu0 0.0
          %1017 = vmatprep.subr.mxu0 0.0
          %1018 = vmatpush1.xpose.msra.mxu0 0.0
          %1019 = vmatprep.subr.mxu0 0.0
          %1020 = vmatpush1.xpose.msra.mxu0 0.0
          %1021 = vmatprep.subr.mxu0 0.0
          %1022 = vmatpush1.xpose.msra.mxu0 0.0
          %1023 = vmatprep.subr.mxu0 0.0
          %1024 = vmatpush1.xpose.msra.mxu0 %v991
          %1025 = vmatprep.subr.mxu0 0.0
          %1026 = vmatpush2.xpose.msra.mxu0 0.0
          %1027 = vmatprep.subr.mxu0 0.0
          %1028 = vmatpush2.xpose.msra.mxu0 0.0
          %1029 = vmatprep.subr.mxu0 0.0
          %1030 = vmatpush2.xpose.msra.mxu0 0.0
          %1031 = vmatprep.subr.mxu0 0.0
          %1032 = vmatpush2.xpose.msra.mxu0 0.0
          %1033 = vmatprep.subr.mxu0 0.0
          %1034 = vmatpush2.xpose.msra.mxu0 0.0
          %1035 = vmatprep.subr.mxu0 0.0
          %1036 = vmatpush2.xpose.msra.mxu0 0.0
          %1037 = vmatprep.subr.mxu0 0.0
          %1038 = vmatpush2.xpose.msra.mxu0 0.0
          %1039 = vmatprep.subr.mxu0 0.0
          %1040 = vmatpush2.xpose.msra.mxu0 0.0
          %1041 = vmatprep.subr.mxu0 0.0
          %1042 = vmatpush2.xpose.msra.mxu0 0.0
          %1043 = vmatprep.subr.mxu0 0.0
          %1044 = vmatpush2.xpose.msra.mxu0 0.0
          %1045 = vmatprep.subr.mxu0 0.0
          %1046 = vmatpush2.xpose.msra.mxu0 0.0
          %1047 = vmatprep.subr.mxu0 0.0
          %1048 = vmatpush2.xpose.msra.mxu0 0.0
          %1049 = vmatprep.subr.mxu0 0.0
          %1050 = vmatpush2.xpose.msra.mxu0 0.0
          %1051 = vmatprep.subr.mxu0 0.0
          %1052 = vmatpush2.xpose.msra.mxu0 0.0
          %1053 = vmatprep.subr.mxu0 0.0
          %1054 = vmatpush2.xpose.msra.mxu0 0.0
          %1055 = vmatprep.subr.mxu0 0.0
          %1056 = vmatpush2.xpose.msra.mxu0 0.0
          %1057 = vmatprep.mubr.f32.mxu0 0.0
          %1058 = vmatmul.mubr.f32.gmra.mxu0 %v989
          %v1059 = vpop.f32.mrf.mxu0
          %v1060 = vadd.f32 %v525, %v1059
          %v1061 = vpop.f32.mrf.mxu0
          %1062 = vdwg.mxu0
          %v1063 = vsel %vm658, %v1060, -inf
          %1064 = vmax.xlane.f32.xlu0 %v1063
          %v1065 = vpop.xlane.xlu0 %1064
          %v1066 = vsub.f32 %v1060, %v1065
          %v1067 = vmul.f32 %v1066, 1.442695
          %v1068 = vpow.pop %v1067
          %v1069 = vsel %vm658, %v1068, 0.0
          %1070 = vadd.xlane.f32.xlu0 %v1069
          %v1071 = vpop.xlane.xlu0 %1070
          %v1072 = vrcp.pop %v1071
          %v1073 = vmul.f32 %v1068, %v1072
          %1074 = vrot.lane.b32.xlu0 %v652, 48
          %v1075 = vpop.permute.xlu0 %1074
          %v1078 = vsel %vm658, %v1073, 0
          %1080 = vmatprep.subr.mxu0 0.0
          %1081 = vmatpush1.msra.mxu0 0.0
          %1082 = vmatprep.subr.mxu0 0.0
          %1083 = vmatpush1.msra.mxu0 0.0
          %1084 = vmatprep.subr.mxu0 0.0
          %1085 = vmatpush1.msra.mxu0 0.0
          %1086 = vmatprep.subr.mxu0 0.0
          %1087 = vmatpush1.msra.mxu0 0.0
          %1088 = vmatprep.subr.mxu0 0.0
          %1089 = vmatpush1.msra.mxu0 0.0
          %1090 = vmatprep.subr.mxu0 0.0
          %1091 = vmatpush1.msra.mxu0 0.0
          %1092 = vmatprep.subr.mxu0 0.0
          %1093 = vmatpush1.msra.mxu0 0.0
          %1094 = vmatprep.subr.mxu0 0.0
          %1095 = vmatpush1.msra.mxu0 0.0
          %1096 = vmatprep.subr.mxu0 0.0
          %1097 = vmatpush1.msra.mxu0 0.0
          %1098 = vmatprep.subr.mxu0 0.0
          %1099 = vmatpush1.msra.mxu0 0.0
          %1100 = vmatprep.subr.mxu0 0.0
          %1101 = vmatpush1.msra.mxu0 0.0
          %1102 = vmatprep.subr.mxu0 0.0
          %1103 = vmatpush1.msra.mxu0 0.0
          %1104 = vmatprep.subr.mxu0 0.0
          %1105 = vmatpush1.msra.mxu0 0.0
          %1106 = vmatprep.subr.mxu0 0.0
          %1107 = vmatpush1.msra.mxu0 0.0
          %1108 = vmatprep.subr.mxu0 0.0
          %1109 = vmatpush1.msra.mxu0 0.0
          %1110 = vmatprep.subr.mxu0 0.0
          %1111 = vmatpush1.msra.mxu0 %v1075
          %1112 = vmatprep.subr.mxu0 0.0
          %1113 = vmatpush2.msra.mxu0 0.0
          %1114 = vmatprep.subr.mxu0 0.0
          %1115 = vmatpush2.msra.mxu0 0.0
          %1116 = vmatprep.subr.mxu0 0.0
          %1117 = vmatpush2.msra.mxu0 0.0
          %1118 = vmatprep.subr.mxu0 0.0
          %1119 = vmatpush2.msra.mxu0 0.0
          %1120 = vmatprep.subr.mxu0 0.0
          %1121 = vmatpush2.msra.mxu0 0.0
          %1122 = vmatprep.subr.mxu0 0.0
          %1123 = vmatpush2.msra.mxu0 0.0
          %1124 = vmatprep.subr.mxu0 0.0
          %1125 = vmatpush2.msra.mxu0 0.0
          %1126 = vmatprep.subr.mxu0 0.0
          %1127 = vmatpush2.msra.mxu0 0.0
          %1128 = vmatprep.subr.mxu0 0.0
          %1129 = vmatpush2.msra.mxu0 0.0
          %1130 = vmatprep.subr.mxu0 0.0
          %1131 = vmatpush2.msra.mxu0 0.0
          %1132 = vmatprep.subr.mxu0 0.0
          %1133 = vmatpush2.msra.mxu0 0.0
          %1134 = vmatprep.subr.mxu0 0.0
          %1135 = vmatpush2.msra.mxu0 0.0
          %1136 = vmatprep.subr.mxu0 0.0
          %1137 = vmatpush2.msra.mxu0 0.0
          %1138 = vmatprep.subr.mxu0 0.0
          %1139 = vmatpush2.msra.mxu0 0.0
          %1140 = vmatprep.subr.mxu0 0.0
          %1141 = vmatpush2.msra.mxu0 0.0
          %1142 = vmatprep.subr.mxu0 0.0
          %1143 = vmatpush2.msra.mxu0 0.0
          %1144 = vmatprep.mubr.f32.mxu0 0.0
          %1145 = vmatmul.mubr.f32.gmra.mxu0 %v1078
          %v1146 = vpop.f32.mrf.mxu0
          %v1147 = vadd.f32 0.0, %v1146
          %v1148 = vpop.f32.mrf.mxu0
          %1149 = vdwg.mxu0
          %1150 = vrot.lane.b32.xlu0 %v652, 104
          %v1151 = vpop.permute.xlu0 %1150
          %1152 = vrot.lane.b32.xlu0 %v652, 72
          %v1153 = vpop.permute.xlu0 %1152
          %v1154 = vsel %vm658, %v1151, 0
          %v1156 = vsel %vm658, %v1153, 0
          %1158 = vmatprep.subr.mxu0 0.0
          %1159 = vmatpush1.xpose.msra.mxu0 0.0
          %1160 = vmatprep.subr.mxu0 0.0
          %1161 = vmatpush1.xpose.msra.mxu0 0.0
          %1162 = vmatprep.subr.mxu0 0.0
          %1163 = vmatpush1.xpose.msra.mxu0 0.0
          %1164 = vmatprep.subr.mxu0 0.0
          %1165 = vmatpush1.xpose.msra.mxu0 0.0
          %1166 = vmatprep.subr.mxu0 0.0
          %1167 = vmatpush1.xpose.msra.mxu0 0.0
          %1168 = vmatprep.subr.mxu0 0.0
          %1169 = vmatpush1.xpose.msra.mxu0 0.0
          %1170 = vmatprep.subr.mxu0 0.0
          %1171 = vmatpush1.xpose.msra.mxu0 0.0
          %1172 = vmatprep.subr.mxu0 0.0
          %1173 = vmatpush1.xpose.msra.mxu0 0.0
          %1174 = vmatprep.subr.mxu0 0.0
          %1175 = vmatpush1.xpose.msra.mxu0 0.0
          %1176 = vmatprep.subr.mxu0 0.0
          %1177 = vmatpush1.xpose.msra.mxu0 0.0
          %1178 = vmatprep.subr.mxu0 0.0
          %1179 = vmatpush1.xpose.msra.mxu0 0.0
          %1180 = vmatprep.subr.mxu0 0.0
          %1181 = vmatpush1.xpose.msra.mxu0 0.0
          %1182 = vmatprep.subr.mxu0 0.0
          %1183 = vmatpush1.xpose.msra.mxu0 0.0
          %1184 = vmatprep.subr.mxu0 0.0
          %1185 = vmatpush1.xpose.msra.mxu0 0.0
          %1186 = vmatprep.subr.mxu0 0.0
          %1187 = vmatpush1.xpose.msra.mxu0 0.0
          %1188 = vmatprep.subr.mxu0 0.0
          %1189 = vmatpush1.xpose.msra.mxu0 %v1156
          %1190 = vmatprep.subr.mxu0 0.0
          %1191 = vmatpush2.xpose.msra.mxu0 0.0
          %1192 = vmatprep.subr.mxu0 0.0
          %1193 = vmatpush2.xpose.msra.mxu0 0.0
          %1194 = vmatprep.subr.mxu0 0.0
          %1195 = vmatpush2.xpose.msra.mxu0 0.0
          %1196 = vmatprep.subr.mxu0 0.0
          %1197 = vmatpush2.xpose.msra.mxu0 0.0
          %1198 = vmatprep.subr.mxu0 0.0
          %1199 = vmatpush2.xpose.msra.mxu0 0.0
          %1200 = vmatprep.subr.mxu0 0.0
          %1201 = vmatpush2.xpose.msra.mxu0 0.0
          %1202 = vmatprep.subr.mxu0 0.0
          %1203 = vmatpush2.xpose.msra.mxu0 0.0
          %1204 = vmatprep.subr.mxu0 0.0
          %1205 = vmatpush2.xpose.msra.mxu0 0.0
          %1206 = vmatprep.subr.mxu0 0.0
          %1207 = vmatpush2.xpose.msra.mxu0 0.0
          %1208 = vmatprep.subr.mxu0 0.0
          %1209 = vmatpush2.xpose.msra.mxu0 0.0
          %1210 = vmatprep.subr.mxu0 0.0
          %1211 = vmatpush2.xpose.msra.mxu0 0.0
          %1212 = vmatprep.subr.mxu0 0.0
          %1213 = vmatpush2.xpose.msra.mxu0 0.0
          %1214 = vmatprep.subr.mxu0 0.0
          %1215 = vmatpush2.xpose.msra.mxu0 0.0
          %1216 = vmatprep.subr.mxu0 0.0
          %1217 = vmatpush2.xpose.msra.mxu0 0.0
          %1218 = vmatprep.subr.mxu0 0.0
          %1219 = vmatpush2.xpose.msra.mxu0 0.0
          %1220 = vmatprep.subr.mxu0 0.0
          %1221 = vmatpush2.xpose.msra.mxu0 0.0
          %1222 = vmatprep.mubr.f32.mxu0 0.0
          %1223 = vmatmul.mubr.f32.gmra.mxu0 %v1154
          %v1224 = vpop.f32.mrf.mxu0
          %v1225 = vadd.f32 %v525, %v1224
          %v1226 = vpop.f32.mrf.mxu0
          %1227 = vdwg.mxu0
          %v1228 = vsel %vm658, %v1225, -inf
          %1229 = vmax.xlane.f32.xlu0 %v1228
          %v1230 = vpop.xlane.xlu0 %1229
          %v1231 = vsub.f32 %v1225, %v1230
          %v1232 = vmul.f32 %v1231, 1.442695
          %v1233 = vpow.pop %v1232
          %v1234 = vsel %vm658, %v1233, 0.0
          %1235 = vadd.xlane.f32.xlu0 %v1234
          %v1236 = vpop.xlane.xlu0 %1235
          %v1237 = vrcp.pop %v1236
          %v1238 = vmul.f32 %v1233, %v1237
          %1239 = vrot.lane.b32.xlu0 %v652, 40
          %v1240 = vpop.permute.xlu0 %1239
          %v1243 = vsel %vm658, %v1238, 0
          %1245 = vmatprep.subr.mxu0 0.0
          %1246 = vmatpush1.msra.mxu0 0.0
          %1247 = vmatprep.subr.mxu0 0.0
          %1248 = vmatpush1.msra.mxu0 0.0
          %1249 = vmatprep.subr.mxu0 0.0
          %1250 = vmatpush1.msra.mxu0 0.0
          %1251 = vmatprep.subr.mxu0 0.0
          %1252 = vmatpush1.msra.mxu0 0.0
          %1253 = vmatprep.subr.mxu0 0.0
          %1254 = vmatpush1.msra.mxu0 0.0
          %1255 = vmatprep.subr.mxu0 0.0
          %1256 = vmatpush1.msra.mxu0 0.0
          %1257 = vmatprep.subr.mxu0 0.0
          %1258 = vmatpush1.msra.mxu0 0.0
          %1259 = vmatprep.subr.mxu0 0.0
          %1260 = vmatpush1.msra.mxu0 0.0
          %1261 = vmatprep.subr.mxu0 0.0
          %1262 = vmatpush1.msra.mxu0 0.0
          %1263 = vmatprep.subr.mxu0 0.0
          %1264 = vmatpush1.msra.mxu0 0.0
          %1265 = vmatprep.subr.mxu0 0.0
          %1266 = vmatpush1.msra.mxu0 0.0
          %1267 = vmatprep.subr.mxu0 0.0
          %1268 = vmatpush1.msra.mxu0 0.0
          %1269 = vmatprep.subr.mxu0 0.0
          %1270 = vmatpush1.msra.mxu0 0.0
          %1271 = vmatprep.subr.mxu0 0.0
          %1272 = vmatpush1.msra.mxu0 0.0
          %1273 = vmatprep.subr.mxu0 0.0
          %1274 = vmatpush1.msra.mxu0 0.0
          %1275 = vmatprep.subr.mxu0 0.0
          %1276 = vmatpush1.msra.mxu0 %v1240
          %1277 = vmatprep.subr.mxu0 0.0
          %1278 = vmatpush2.msra.mxu0 0.0
          %1279 = vmatprep.subr.mxu0 0.0
          %1280 = vmatpush2.msra.mxu0 0.0
          %1281 = vmatprep.subr.mxu0 0.0
          %1282 = vmatpush2.msra.mxu0 0.0
          %1283 = vmatprep.subr.mxu0 0.0
          %1284 = vmatpush2.msra.mxu0 0.0
          %1285 = vmatprep.subr.mxu0 0.0
          %1286 = vmatpush2.msra.mxu0 0.0
          %1287 = vmatprep.subr.mxu0 0.0
          %1288 = vmatpush2.msra.mxu0 0.0
          %1289 = vmatprep.subr.mxu0 0.0
          %1290 = vmatpush2.msra.mxu0 0.0
          %1291 = vmatprep.subr.mxu0 0.0
          %1292 = vmatpush2.msra.mxu0 0.0
          %1293 = vmatprep.subr.mxu0 0.0
          %1294 = vmatpush2.msra.mxu0 0.0
          %1295 = vmatprep.subr.mxu0 0.0
          %1296 = vmatpush2.msra.mxu0 0.0
          %1297 = vmatprep.subr.mxu0 0.0
          %1298 = vmatpush2.msra.mxu0 0.0
          %1299 = vmatprep.subr.mxu0 0.0
          %1300 = vmatpush2.msra.mxu0 0.0
          %1301 = vmatprep.subr.mxu0 0.0
          %1302 = vmatpush2.msra.mxu0 0.0
          %1303 = vmatprep.subr.mxu0 0.0
          %1304 = vmatpush2.msra.mxu0 0.0
          %1305 = vmatprep.subr.mxu0 0.0
          %1306 = vmatpush2.msra.mxu0 0.0
          %1307 = vmatprep.subr.mxu0 0.0
          %1308 = vmatpush2.msra.mxu0 0.0
          %1309 = vmatprep.mubr.f32.mxu0 0.0
          %1310 = vmatmul.mubr.f32.gmra.mxu0 %v1243
          %v1311 = vpop.f32.mrf.mxu0
          %v1312 = vadd.f32 0.0, %v1311
          %v1313 = vpop.f32.mrf.mxu0
          %1314 = vdwg.mxu0
          %1316 = vrot.lane.b32.xlu0 %v982, 8
          %v1317 = vpop.permute.xlu0 %1316
          %1320 = vrot.lane.b32.xlu0 %v1147, 16
          %v1321 = vpop.permute.xlu0 %1320
          %1324 = vrot.lane.b32.xlu0 %v1312, 24
          %v1325 = vpop.permute.xlu0 %1324
          %v1327 = vsel %vm658, %v817, %v1317
          %vm1328 = vcmask 130048
          %v1329 = vsel %vm1328, %v1327, %v1321
          %vm1330 = vcmask 195584
          %v1331 = vsel %vm1330, %v1329, %v1325
          %s1332 = scalar_lea.vmem %s6, %s568
          %v1333 = vld [vmem:[%s1332] sm:$0xff]
          %v1334 = vld [vmem:[%s1332 + $0x8] sm:$0xff]
          %v1335 = vld [vmem:[%s1332 + $0x10] sm:$0xff]
          %v1336 = vld [vmem:[%s1332 + $0x18] sm:$0xff]
          %v1338 = vsel %vm537, %v1331, 0
          %1340 = vmatprep.subr.mxu0 0.0
          %1341 = vmatpush1.msra.mxu0 0.0
          %1342 = vmatprep.subr.mxu0 0.0
          %1343 = vmatpush1.msra.mxu0 0.0
          %1344 = vmatprep.subr.mxu0 0.0
          %1345 = vmatpush1.msra.mxu0 0.0
          %1346 = vmatprep.subr.mxu0 0.0
          %1347 = vmatpush1.msra.mxu0 0.0
          %1348 = vmatprep.subr.mxu0 0.0
          %1349 = vmatpush1.msra.mxu0 0.0
          %1350 = vmatprep.subr.mxu0 0.0
          %1351 = vmatpush1.msra.mxu0 0.0
          %1352 = vmatprep.subr.mxu0 0.0
          %1353 = vmatpush1.msra.mxu0 0.0
          %1354 = vmatprep.subr.mxu0 0.0
          %1355 = vmatpush1.msra.mxu0 0.0
          %1356 = vmatprep.subr.mxu0 0.0
          %1357 = vmatpush1.msra.mxu0 0.0
          %1358 = vmatprep.subr.mxu0 0.0
          %1359 = vmatpush1.msra.mxu0 0.0
          %1360 = vmatprep.subr.mxu0 0.0
          %1361 = vmatpush1.msra.mxu0 0.0
          %1362 = vmatprep.subr.mxu0 0.0
          %1363 = vmatpush1.msra.mxu0 0.0
          %1364 = vmatprep.subr.mxu0 0.0
          %1365 = vmatpush1.msra.mxu0 %v1336
          %1366 = vmatprep.subr.mxu0 0.0
          %1367 = vmatpush1.msra.mxu0 %v1335
          %1368 = vmatprep.subr.mxu0 0.0
          %1369 = vmatpush1.msra.mxu0 %v1334
          %1370 = vmatprep.subr.mxu0 0.0
          %1371 = vmatpush1.msra.mxu0 %v1333
          %1372 = vmatprep.subr.mxu0 0.0
          %1373 = vmatpush2.msra.mxu0 0.0
          %1374 = vmatprep.subr.mxu0 0.0
          %1375 = vmatpush2.msra.mxu0 0.0
          %1376 = vmatprep.subr.mxu0 0.0
          %1377 = vmatpush2.msra.mxu0 0.0
          %1378 = vmatprep.subr.mxu0 0.0
          %1379 = vmatpush2.msra.mxu0 0.0
          %1380 = vmatprep.subr.mxu0 0.0
          %1381 = vmatpush2.msra.mxu0 0.0
          %1382 = vmatprep.subr.mxu0 0.0
          %1383 = vmatpush2.msra.mxu0 0.0
          %1384 = vmatprep.subr.mxu0 0.0
          %1385 = vmatpush2.msra.mxu0 0.0
          %1386 = vmatprep.subr.mxu0 0.0
          %1387 = vmatpush2.msra.mxu0 0.0
          %1388 = vmatprep.subr.mxu0 0.0
          %1389 = vmatpush2.msra.mxu0 0.0
          %1390 = vmatprep.subr.mxu0 0.0
          %1391 = vmatpush2.msra.mxu0 0.0
          %1392 = vmatprep.subr.mxu0 0.0
          %1393 = vmatpush2.msra.mxu0 0.0
          %1394 = vmatprep.subr.mxu0 0.0
          %1395 = vmatpush2.msra.mxu0 0.0
          %1396 = vmatprep.subr.mxu0 0.0
          %1397 = vmatpush2.msra.mxu0 0.0
          %1398 = vmatprep.subr.mxu0 0.0
          %1399 = vmatpush2.msra.mxu0 0.0
          %1400 = vmatprep.subr.mxu0 0.0
          %1401 = vmatpush2.msra.mxu0 0.0
          %1402 = vmatprep.subr.mxu0 0.0
          %1403 = vmatpush2.msra.mxu0 0.0
          %1404 = vmatprep.mubr.f32.mxu0 0.0
          %1405 = vmatmul.mubr.f32.gmra.mxu0 %v1338
          %v1406 = vpop.f32.mrf.mxu0
          %v1407 = vadd.f32 0.0, %v1406
          %v1408 = vpop.f32.mrf.mxu0
          %1409 = vdwg.mxu0
          %v1410 = vadd.f32 %v532, %v1407
          %s1411 = scalar_lea.vmem %s7, %s527
          %v1412 = vld [vmem:[%s1411] sm:$0x1]
          %v1414 = vlaneseq
          %v1415 = vshrl.u32 %v1414, 7
          %v1416 = vsub.s32 0, %v1415
          %v1417 = vrot.slane %v1412, %v1416
          %v1419 = vadd.f32 %v1410, %v1417
          %s1420 = scalar_lea.vmem %s8, %s527
          %v1421 = vld [vmem:[%s1420] sm:$0x1]
          %s1422 = scalar_lea.vmem %s9, %s527
          %v1423 = vld [vmem:[%s1422] sm:$0x1]
          %v1424 = vsel %vm537, %v1419, 0.0
          %1425 = vadd.xlane.f32.xlu0 %v1424
          %v1426 = vpop.xlane.xlu0 %1425
          %v1427 = vmul.f32 %v1426, %v541
          %v1428 = vmul.f32 %v1419, %v1419
          %v1429 = vsel %vm537, %v1428, 0.0
          %1430 = vadd.xlane.f32.xlu0 %v1429
          %v1431 = vpop.xlane.xlu0 %1430
          %v1432 = vmul.f32 %v1431, %v541
          %v1433 = vmul.f32 %v1427, %v1427
          %v1434 = vsub.f32 %v1432, %v1433
          %v1435 = vsub.f32 %v1419, %v1427
          %v1436 = vadd.f32 %v1434, 1e-05
          %v1437 = vrsqrt.pop %v1436
          %v1438 = vmul.f32 %v1435, %v1437
          %v1440 = vlaneseq
          %v1441 = vshrl.u32 %v1440, 7
          %v1442 = vsub.s32 0, %v1441
          %v1443 = vrot.slane %v1421, %v1442
          %v1445 = vmul.f32 %v1438, %v1443
          %v1447 = vlaneseq
          %v1448 = vshrl.u32 %v1447, 7
          %v1449 = vsub.s32 0, %v1448
          %v1450 = vrot.slane %v1423, %v1449
          %v1452 = vadd.f32 %v1445, %v1450
          %s1453 = scalar_lea.vmem %s10, %s568
          %v1454 = vld [vmem:[%s1453] sm:$0xff]
          %v1455 = vld [vmem:[%s1453 + $0x8] sm:$0xff]
          %v1456 = vld [vmem:[%s1453 + $0x10] sm:$0xff]
          %v1457 = vld [vmem:[%s1453 + $0x18] sm:$0xff]
          %s1458 = scalar_lea.vmem %s11, %s527
          %v1459 = vld [vmem:[%s1458] sm:$0x1]
          %v1461 = vlaneseq
          %v1462 = vshrl.u32 %v1461, 7
          %v1463 = vsub.s32 0, %v1462
          %v1464 = vrot.slane %v1459, %v1463
          %v1467 = vsel %vm537, %v1452, 0
          %1469 = vmatprep.subr.mxu0 0.0
          %1470 = vmatpush1.msra.mxu0 0.0
          %1471 = vmatprep.subr.mxu0 0.0
          %1472 = vmatpush1.msra.mxu0 0.0
          %1473 = vmatprep.subr.mxu0 0.0
          %1474 = vmatpush1.msra.mxu0 0.0
          %1475 = vmatprep.subr.mxu0 0.0
          %1476 = vmatpush1.msra.mxu0 0.0
          %1477 = vmatprep.subr.mxu0 0.0
          %1478 = vmatpush1.msra.mxu0 0.0
          %1479 = vmatprep.subr.mxu0 0.0
          %1480 = vmatpush1.msra.mxu0 0.0
          %1481 = vmatprep.subr.mxu0 0.0
          %1482 = vmatpush1.msra.mxu0 0.0
          %1483 = vmatprep.subr.mxu0 0.0
          %1484 = vmatpush1.msra.mxu0 0.0
          %1485 = vmatprep.subr.mxu0 0.0
          %1486 = vmatpush1.msra.mxu0 0.0
          %1487 = vmatprep.subr.mxu0 0.0
          %1488 = vmatpush1.msra.mxu0 0.0
          %1489 = vmatprep.subr.mxu0 0.0
          %1490 = vmatpush1.msra.mxu0 0.0
          %1491 = vmatprep.subr.mxu0 0.0
          %1492 = vmatpush1.msra.mxu0 0.0
          %1493 = vmatprep.subr.mxu0 0.0
          %1494 = vmatpush1.msra.mxu0 %v1457
          %1495 = vmatprep.subr.mxu0 0.0
          %1496 = vmatpush1.msra.mxu0 %v1456
          %1497 = vmatprep.subr.mxu0 0.0
          %1498 = vmatpush1.msra.mxu0 %v1455
          %1499 = vmatprep.subr.mxu0 0.0
          %1500 = vmatpush1.msra.mxu0 %v1454
          %1501 = vmatprep.subr.mxu0 0.0
          %1502 = vmatpush2.msra.mxu0 0.0
          %1503 = vmatprep.subr.mxu0 0.0
          %1504 = vmatpush2.msra.mxu0 0.0
          %1505 = vmatprep.subr.mxu0 0.0
          %1506 = vmatpush2.msra.mxu0 0.0
          %1507 = vmatprep.subr.mxu0 0.0
          %1508 = vmatpush2.msra.mxu0 0.0
          %1509 = vmatprep.subr.mxu0 0.0
          %1510 = vmatpush2.msra.mxu0 0.0
          %1511 = vmatprep.subr.mxu0 0.0
          %1512 = vmatpush2.msra.mxu0 0.0
          %1513 = vmatprep.subr.mxu0 0.0
          %1514 = vmatpush2.msra.mxu0 0.0
          %1515 = vmatprep.subr.mxu0 0.0
          %1516 = vmatpush2.msra.mxu0 0.0
          %1517 = vmatprep.subr.mxu0 0.0
          %1518 = vmatpush2.msra.mxu0 0.0
          %1519 = vmatprep.subr.mxu0 0.0
          %1520 = vmatpush2.msra.mxu0 0.0
          %1521 = vmatprep.subr.mxu0 0.0
          %1522 = vmatpush2.msra.mxu0 0.0
          %1523 = vmatprep.subr.mxu0 0.0
          %1524 = vmatpush2.msra.mxu0 0.0
          %1525 = vmatprep.subr.mxu0 0.0
          %1526 = vmatpush2.msra.mxu0 0.0
          %1527 = vmatprep.subr.mxu0 0.0
          %1528 = vmatpush2.msra.mxu0 0.0
          %1529 = vmatprep.subr.mxu0 0.0
          %1530 = vmatpush2.msra.mxu0 0.0
          %1531 = vmatprep.subr.mxu0 0.0
          %1532 = vmatpush2.msra.mxu0 0.0
          %1533 = vmatprep.mubr.f32.mxu0 0.0
          %1534 = vmatmul.mubr.f32.gmra.mxu0 %v1467
          %v1535 = vpop.f32.mrf.mxu0
          %v1536 = vadd.f32 %v1464, %v1535
          %v1537 = vpop.f32.mrf.mxu0
          %1538 = vdwg.mxu0
          %v1539 = vmul.f32 %v1536, 0.5
          %v1540 = vmul.f32 %v1536, %v1536
          %v1541 = vmul.f32 %v1540, %v1536
          %v1542 = vmul.f32 %v1541, 0.044715
          %v1543 = vadd.f32 %v1536, %v1542
          %v1544 = vmul.f32 %v1543, 0.7978846
          %v1545 = vtanh.pop %v1544
          %v1546 = vadd.f32 %v1545, 1.0
          %v1547 = vmul.f32 %v1539, %v1546
          %s1548 = smul.u32 %s527, 128
          %s1549 = scalar_lea.vmem %s12, %s1548
          %v1550 = vld [vmem:[%s1549] sm:$0xff]
          %v1551 = vld [vmem:[%s1549 + $0x8] sm:$0xff]
          %v1552 = vld [vmem:[%s1549 + $0x10] sm:$0xff]
          %v1553 = vld [vmem:[%s1549 + $0x18] sm:$0xff]
          %v1554 = vld [vmem:[%s1549 + $0x20] sm:$0xff]
          %v1555 = vld [vmem:[%s1549 + $0x28] sm:$0xff]
          %v1556 = vld [vmem:[%s1549 + $0x30] sm:$0xff]
          %v1557 = vld [vmem:[%s1549 + $0x38] sm:$0xff]
          %v1558 = vld [vmem:[%s1549 + $0x40] sm:$0xff]
          %v1559 = vld [vmem:[%s1549 + $0x48] sm:$0xff]
          %v1560 = vld [vmem:[%s1549 + $0x50] sm:$0xff]
          %v1561 = vld [vmem:[%s1549 + $0x58] sm:$0xff]
          %v1562 = vld [vmem:[%s1549 + $0x60] sm:$0xff]
          %v1563 = vld [vmem:[%s1549 + $0x68] sm:$0xff]
          %v1564 = vld [vmem:[%s1549 + $0x70] sm:$0xff]
          %v1565 = vld [vmem:[%s1549 + $0x78] sm:$0xff]
          %1566 = vmatprep.subr.mxu0 0.0
          %1567 = vmatpush1.msra.mxu0 %v1565
          %1568 = vmatprep.subr.mxu0 0.0
          %1569 = vmatpush1.msra.mxu0 %v1564
          %1570 = vmatprep.subr.mxu0 0.0
          %1571 = vmatpush1.msra.mxu0 %v1563
          %1572 = vmatprep.subr.mxu0 0.0
          %1573 = vmatpush1.msra.mxu0 %v1562
          %1574 = vmatprep.subr.mxu0 0.0
          %1575 = vmatpush1.msra.mxu0 %v1561
          %1576 = vmatprep.subr.mxu0 0.0
          %1577 = vmatpush1.msra.mxu0 %v1560
          %1578 = vmatprep.subr.mxu0 0.0
          %1579 = vmatpush1.msra.mxu0 %v1559
          %1580 = vmatprep.subr.mxu0 0.0
          %1581 = vmatpush1.msra.mxu0 %v1558
          %1582 = vmatprep.subr.mxu0 0.0
          %1583 = vmatpush1.msra.mxu0 %v1557
          %1584 = vmatprep.subr.mxu0 0.0
          %1585 = vmatpush1.msra.mxu0 %v1556
          %1586 = vmatprep.subr.mxu0 0.0
          %1587 = vmatpush1.msra.mxu0 %v1555
          %1588 = vmatprep.subr.mxu0 0.0
          %1589 = vmatpush1.msra.mxu0 %v1554
          %1590 = vmatprep.subr.mxu0 0.0
          %1591 = vmatpush1.msra.mxu0 %v1553
          %1592 = vmatprep.subr.mxu0 0.0
          %1593 = vmatpush1.msra.mxu0 %v1552
          %1594 = vmatprep.subr.mxu0 0.0
          %1595 = vmatpush1.msra.mxu0 %v1551
          %1596 = vmatprep.subr.mxu0 0.0
          %1597 = vmatpush1.msra.mxu0 %v1550
          %1598 = vmatprep.subr.mxu0 0.0
          %1599 = vmatpush2.msra.mxu0 0.0
          %1600 = vmatprep.subr.mxu0 0.0
          %1601 = vmatpush2.msra.mxu0 0.0
          %1602 = vmatprep.subr.mxu0 0.0
          %1603 = vmatpush2.msra.mxu0 0.0
          %1604 = vmatprep.subr.mxu0 0.0
          %1605 = vmatpush2.msra.mxu0 0.0
          %1606 = vmatprep.subr.mxu0 0.0
          %1607 = vmatpush2.msra.mxu0 0.0
          %1608 = vmatprep.subr.mxu0 0.0
          %1609 = vmatpush2.msra.mxu0 0.0
          %1610 = vmatprep.subr.mxu0 0.0
          %1611 = vmatpush2.msra.mxu0 0.0
          %1612 = vmatprep.subr.mxu0 0.0
          %1613 = vmatpush2.msra.mxu0 0.0
          %1614 = vmatprep.subr.mxu0 0.0
          %1615 = vmatpush2.msra.mxu0 0.0
          %1616 = vmatprep.subr.mxu0 0.0
          %1617 = vmatpush2.msra.mxu0 0.0
          %1618 = vmatprep.subr.mxu0 0.0
          %1619 = vmatpush2.msra.mxu0 0.0
          %1620 = vmatprep.subr.mxu0 0.0
          %1621 = vmatpush2.msra.mxu0 0.0
          %1622 = vmatprep.subr.mxu0 0.0
          %1623 = vmatpush2.msra.mxu0 0.0
          %1624 = vmatprep.subr.mxu0 0.0
          %1625 = vmatpush2.msra.mxu0 0.0
          %1626 = vmatprep.subr.mxu0 0.0
          %1627 = vmatpush2.msra.mxu0 0.0
          %1628 = vmatprep.subr.mxu0 0.0
          %1629 = vmatpush2.msra.mxu0 0.0
          %1630 = vmatprep.mubr.f32.mxu0 0.0
          %1631 = vmatmul.mubr.f32.gmra.mxu0 %v1547
          %v1632 = vpop.f32.mrf.mxu0
          %v1633 = vadd.f32 0.0, %v1632
          %v1634 = vpop.f32.mrf.mxu0
          %1635 = vdwg.mxu0
          %v1636 = vadd.f32 %v1419, %v1633
          %s1637 = scalar_lea.vmem %s13, %s527
          %v1638 = vld [vmem:[%s1637] sm:$0x1]
          %v1640 = vlaneseq
          %v1641 = vshrl.u32 %v1640, 7
          %v1642 = vsub.s32 0, %v1641
          %v1643 = vrot.slane %v1638, %v1642
          %v1645 = vadd.f32 %v1636, %v1643
        $region89: #{fwd.1} parent=83 // loop_footer
          %s531 = sadd.s32 1, %s527
        $region90: #{fwd.1} parent=83 // loop_footer_branch
          %526 = sbr.rel target = $region86
        $region91: #{fwd.1} parent=83 // loop_exit
          _
        %v1646 = vld [vmem:[%s14] sm:$0x1]
        %v1647 = vld [vmem:[%s15] sm:$0x1]
        %vm1648 = vcmask 261120
        %v1649 = vsel %vm1648, %v532, 0.0
        %1650 = vadd.xlane.f32.xlu0 %v1649
        %v1651 = vpop.xlane.xlu0 %1650
        %v1652 = vrcp.pop 32.0
        %v1653 = vmul.f32 %v1651, %v1652
        %v1654 = vmul.f32 %v532, %v532
        %v1655 = vsel %vm1648, %v1654, 0.0
        %1656 = vadd.xlane.f32.xlu0 %v1655
        %v1657 = vpop.xlane.xlu0 %1656
        %v1658 = vmul.f32 %v1657, %v1652
        %v1659 = vmul.f32 %v1653, %v1653
        %v1660 = vsub.f32 %v1658, %v1659
        %v1661 = vsub.f32 %v532, %v1653
        %v1662 = vadd.f32 %v1660, 1e-05
        %v1663 = vrsqrt.pop %v1662
        %v1664 = vmul.f32 %v1661, %v1663
        %v1666 = vlaneseq
        %v1667 = vshrl.u32 %v1666, 7
        %v1668 = vsub.s32 0, %v1667
        %v1669 = vrot.slane %v1646, %v1668
        %v1671 = vmul.f32 %v1664, %v1669
        %v1673 = vlaneseq
        %v1674 = vshrl.u32 %v1673, 7
        %v1675 = vsub.s32 0, %v1674
        %v1676 = vrot.slane %v1647, %v1675
        %v1678 = vadd.f32 %v1671, %v1676
        %1679 = vst.msk [vmem:[%s512] sm:$0xff] %vm1648, %v1678
        %s1680 = sand.u32 %s379, 1
        %s1681 = scalar_lea.sflag [#allocation3], %s1680
        %s1682 = sand.u32 %s379, 1
        %s1683 = smul.addr %s1682, 8
        %s1684 = scalar_lea.vmem [#allocation2], %s1683
        // Predicated region
        $region92: #{fwd.1} parent=83 // pred_check
          %p1685 = pneg %p389
        $region93: #{fwd.1} parent=83 // pred_check_branch
          %1687 = sbr.rel (%p1685) target = $region95
        $region94: #{fwd.1} parent=83 // pred_region
          %s1689 = ssub.s32 128, 128
          %1690 = vsyncadd %s1681, %s1689
          %s1691 = smul.addr %s30, 128
          %s1692 = scalar_lea.hbm %s16, %s1691
          %s1694 = sshll.u32 %s1684, 4
          %s1695 = int_to_ptr.vmem [resolvable:$true] %s1694
          %1697 = dma.vmem_to_hbm [thread:$0]  %s1695, 128, %s1692, %s1681
        $region95: #{fwd.1} parent=83 // pred_fallthru
          _
      $region84: #{fwd.1} parent=5 // pred_fallthru
        _
      %p1698 = scmp.le.s32.totalorder 2, %s25
      // Predicated region
      $region96: #{fwd.1} parent=5 // pred_check
        %p1699 = pneg %p1698
      $region97: #{fwd.1} parent=5 // pred_check_branch
        %1701 = sbr.rel (%p1699) target = $region99
      $region98: #{fwd.1} parent=5 // pred_region
        %s1702 = ssub.s32 %s25, 2
        // Predicated region
        $region100: #{fwd.1} parent=98 // pred_check
          %p1703 = pneg %p395
        $region101: #{fwd.1} parent=98 // pred_check_branch
          %1705 = sbr.rel (%p1703) target = $region103
        $region102: #{fwd.1} parent=98 // pred_region
          %s1706 = sand.u32 %s380, 1
          %s1707 = scalar_lea.sflag [#allocation3], %s1706
          %s1708 = sand.u32 %s380, 1
          %s1709 = smul.addr %s1708, 8
          %s1710 = scalar_lea.vmem [#allocation2], %s1709
          %1711 = dma.done %s1707, 128
        $region103: #{fwd.1} parent=98 // pred_fallthru
          _
      $region99: #{fwd.1} parent=5 // pred_fallthru
        _
    $region6: #{fwd.1} parent=1 // loop_footer
      %s29 = sadd.s32 1, %s25
    $region7: #{fwd.1} parent=1 // loop_footer_branch
      %24 = sbr.rel target = $region3
    $region8: #{fwd.1} parent=1 // loop_exit
      _
    %1712 = vsyncpa [#allocation3], 1
    %s1713 = scalar_lea.sflag [#allocation3], 1
    %1714 = vsyncpa %s1713, 1

</llo_original>
